<compile_context>
chip_gen: v7x
topology: tpu7x:2x2x1
jax: 0.10.0
libtpu: 0.0.40
codegen_flags: <defaults>
</compile_context>

<pallas_src>
import functools
import math

import jax
import jax.numpy as jnp
from jax.experimental import pallas as pl
from jax.experimental.pallas import tpu as pltpu

# Small, self-consistent problem sizes (matching the module's intent).
D_MODEL = 32
NHEAD = 4
DIM_FF = 64
SEQ = 8
BATCH = 2
HEAD_DIM = D_MODEL // NHEAD
LN_EPS = 1e-5


def _gelu_tanh(x):
    """tanh-approximate GELU; tanh lowers to the EUP (separate bundle slot)."""
    c = math.sqrt(2.0 / math.pi)
    return 0.5 * x * (1.0 + jnp.tanh(c * (x + 0.044715 * x * x * x)))


def _layernorm(x, gamma, beta):
    mu = jnp.mean(x, axis=-1, keepdims=True)
    xc = x - mu
    var = jnp.mean(xc * xc, axis=-1, keepdims=True)
    return xc * jax.lax.rsqrt(var + LN_EPS) * gamma + beta


def encoder_layer_kernel(x_ref, wq_ref, wk_ref, wv_ref, wo_ref, w1_ref, w2_ref,
                         vec_ref, o_ref, *, batch, nhead):
    """One grid step processes all N = S*B tokens.

    x_ref  : (N, E) f32, rows interleaved batch-wise (row = s*B + b)
    wq_ref : (E, E) bf16  Wq^T with 1/sqrt(Dh) folded in
    wk_ref : (E, E) bf16  Wk^T
    wv_ref : (E, E) bf16  Wv^T
    wo_ref : (E, E) bf16  Wout^T
    w1_ref : (E, F) bf16  W1^T
    w2_ref : (F, E) bf16  W2^T
    vec_ref: (16, max(E,F)) f32 packed biases / LayerNorm params (row-sliced)
    """
    n, e = x_ref.shape
    f = w2_ref.shape[0]
    dh = e // nhead

    x = x_ref[...]                                   # (N, E) f32 (kept for residual)
    x_bf = x.astype(jnp.bfloat16)

    # Bias / LayerNorm rows (sublane slices — cheap; lane slices start at 0).
    b_q = vec_ref[0:1, 0:e]                          # already scaled by 1/sqrt(Dh)
    b_k = vec_ref[1:2, 0:e]
    b_v = vec_ref[2:3, 0:e]
    b_o = vec_ref[3:4, 0:e]
    b_1 = vec_ref[4:5, 0:f]
    b_2 = vec_ref[5:6, 0:e]
    g1 = vec_ref[6:7, 0:e]
    be1 = vec_ref[7:8, 0:e]
    g2 = vec_ref[8:9, 0:e]
    be2 = vec_ref[9:10, 0:e]

    # --- Q / K / V projections (three lane-aligned matmuls, no packed-QKV slicing)
    q = jnp.dot(x_bf, wq_ref[...], preferred_element_type=jnp.float32) + b_q
    k = jnp.dot(x_bf, wk_ref[...], preferred_element_type=jnp.float32) + b_k
    v = jnp.dot(x_bf, wv_ref[...], preferred_element_type=jnp.float32) + b_v
    q_bf = q.astype(jnp.bfloat16)
    k_bf = k.astype(jnp.bfloat16)
    v_bf = v.astype(jnp.bfloat16)

    # Cross-batch mask (boolean only; applied multiplicatively after exp).
    # Row i belongs to batch i % batch (seq-first flatten); batch is a power of
    # two so the modulo is a bitwise AND.
    ii = jax.lax.broadcasted_iota(jnp.int32, (n, n), 0)
    jj = jax.lax.broadcasted_iota(jnp.int32, (n, n), 1)
    same_batch = ((ii ^ jj) & (batch - 1)) == 0

    # Per-head attention with head-column masks instead of lane-offset slices.
    col = jax.lax.broadcasted_iota(jnp.int32, (1, e), 1)
    ctx = jnp.zeros((n, e), jnp.float32)
    for h in range(nhead):
        head_mask = ((col >= h * dh) & (col < (h + 1) * dh)).astype(jnp.bfloat16)
        k_h = k_bf * head_mask                       # (N, E), only head-h cols nonzero
        v_h = v_bf * head_mask
        # s[n, m] = sum_{e in head h} q[n, e] * k[m, e]
        s = jax.lax.dot_general(q_bf, k_h, (((1,), (1,)), ((), ())),
                                preferred_element_type=jnp.float32)     # (N, N)
        p = jnp.exp(s - jnp.max(s, axis=-1, keepdims=True))
        p = jnp.where(same_batch, p, 0.0)            # multiplicative cross-batch zeroing
        p = p * pl.reciprocal(jnp.sum(p, axis=-1, keepdims=True), approx=True)
        # v_h's non-head columns are zero, so each head writes only its own
        # columns of ctx — the per-head concat is just this accumulation.
        ctx = ctx + jnp.dot(p.astype(jnp.bfloat16), v_h,
                            preferred_element_type=jnp.float32)         # (N, E)

    attn = jnp.dot(ctx.astype(jnp.bfloat16), wo_ref[...],
                   preferred_element_type=jnp.float32) + b_o

    # --- residual + norm1 (dropout1 = identity at inference) -----------------
    y = _layernorm(x + attn, g1, be1)

    # --- feed-forward: linear2(gelu(linear1(y))) ------------------------------
    h1 = jnp.dot(y.astype(jnp.bfloat16), w1_ref[...],
                 preferred_element_type=jnp.float32) + b_1
    h1 = _gelu_tanh(h1)
    h2 = jnp.dot(h1.astype(jnp.bfloat16), w2_ref[...],
                 preferred_element_type=jnp.float32) + b_2

    # --- residual + norm2 (dropout2 = identity at inference) -----------------
    z = _layernorm(y + h2, g2, be2)
    o_ref[...] = z.astype(o_ref.dtype)


def transformer_encoder_layer(src, packed):
    """src: (S, B, E) f32 (PyTorch seq-first layout). Returns (S, B, E)."""
    wq_t, wk_t, wv_t, wo_t, w1_t, w2_t, vec = packed
    S, B, E = src.shape
    assert B & (B - 1) == 0, "batch must be a power of two for the bitwise mask"
    N = S * B
    x2d = src.reshape(N, E)                          # zero-copy reshape, no transpose

    kernel = functools.partial(encoder_layer_kernel, batch=B, nhead=NHEAD)
    args = (x2d, wq_t, wk_t, wv_t, wo_t, w1_t, w2_t, vec)
    out2d = pl.pallas_call(
        kernel,
        out_shape=jax.ShapeDtypeStruct((N, E), jnp.float32),
        grid=(1,),                                   # single grid step: batch folded
        in_specs=[pl.BlockSpec(a.shape, lambda i: (0, 0)) for a in args],
        out_specs=pl.BlockSpec((N, E), lambda i: (0, 0)),
        compiler_params=pltpu.CompilerParams(dimension_semantics=("arbitrary",)),
    )(*args)
    return out2d.reshape(S, B, E)


def init_params(key):
    """Deterministic synthetic parameters in PyTorch layouts
    (nn.MultiheadAttention in/out proj, nn.Linear, nn.LayerNorm)."""
    ks = jax.random.split(key, 8)
    scale = 0.1
    inw = scale * jax.random.normal(ks[0], (3 * D_MODEL, D_MODEL), jnp.float32)
    inb = scale * jax.random.normal(ks[1], (3 * D_MODEL,), jnp.float32)
    outw = scale * jax.random.normal(ks[2], (D_MODEL, D_MODEL), jnp.float32)
    outb = scale * jax.random.normal(ks[3], (D_MODEL,), jnp.float32)
    w1 = scale * jax.random.normal(ks[4], (DIM_FF, D_MODEL), jnp.float32)
    b1 = scale * jax.random.normal(ks[5], (DIM_FF,), jnp.float32)
    w2 = scale * jax.random.normal(ks[6], (D_MODEL, DIM_FF), jnp.float32)
    b2 = scale * jax.random.normal(ks[7], (D_MODEL,), jnp.float32)
    g1 = jnp.ones((D_MODEL,), jnp.float32)
    be1 = jnp.zeros((D_MODEL,), jnp.float32)
    g2 = jnp.ones((D_MODEL,), jnp.float32)
    be2 = jnp.zeros((D_MODEL,), jnp.float32)
    return (inw, inb, outw, outb, w1, b1, w2, b2, g1, be1, g2, be2)


def pack_params(params):
    """One-time host-side prep: pre-transpose weights into individually
    lane-aligned arrays, fold the 1/sqrt(Dh) attention scale into Wq^T / b_q,
    and pack the small vectors (biases, LayerNorm params) into one f32 buffer."""
    inw, inb, outw, outb, w1, b1, w2, b2, g1, be1, g2, be2 = params
    scale = 1.0 / math.sqrt(HEAD_DIM)
    wq, wk, wv = inw[:D_MODEL], inw[D_MODEL:2 * D_MODEL], inw[2 * D_MODEL:]
    bq, bk, bv = inb[:D_MODEL], inb[D_MODEL:2 * D_MODEL], inb[2 * D_MODEL:]

    wq_t = (wq.T * scale).astype(jnp.bfloat16)       # (E, E), scale folded
    wk_t = wk.T.astype(jnp.bfloat16)                 # (E, E)
    wv_t = wv.T.astype(jnp.bfloat16)                 # (E, E)
    wo_t = outw.T.astype(jnp.bfloat16)               # (E, E)
    w1_t = w1.T.astype(jnp.bfloat16)                 # (E, F)
    w2_t = w2.T.astype(jnp.bfloat16)                 # (F, E)

    vw = max(D_MODEL, DIM_FF)
    vec = jnp.zeros((16, vw), jnp.float32)
    vec = vec.at[0, :D_MODEL].set(bq * scale)        # scaled Q bias
    vec = vec.at[1, :D_MODEL].set(bk)
    vec = vec.at[2, :D_MODEL].set(bv)
    vec = vec.at[3, :D_MODEL].set(outb)
    vec = vec.at[4, :DIM_FF].set(b1)
    vec = vec.at[5, :D_MODEL].set(b2)
    vec = vec.at[6, :D_MODEL].set(g1)
    vec = vec.at[7, :D_MODEL].set(be1)
    vec = vec.at[8, :D_MODEL].set(g2)
    vec = vec.at[9, :D_MODEL].set(be2)
    return (wq_t, wk_t, wv_t, wo_t, w1_t, w2_t, vec)


def reference(src, params):
    """Pure-JAX f32 reference of the same forward pass (exact erf GELU)."""
    inw, inb, outw, outb, w1, b1, w2, b2, g1, be1, g2, be2 = params
    x = jnp.transpose(src, (1, 0, 2)).astype(jnp.float32)             # (B,S,E)

    def one(xb):
        qkv = xb @ inw.T + inb
        q, k, v = qkv[:, :D_MODEL], qkv[:, D_MODEL:2 * D_MODEL], qkv[:, 2 * D_MODEL:]
        outs = []
        for h in range(NHEAD):
            sl = slice(h * HEAD_DIM, (h + 1) * HEAD_DIM)
            s = (q[:, sl] / math.sqrt(HEAD_DIM)) @ k[:, sl].T
            p = jax.nn.softmax(s, axis=-1)
            outs.append(p @ v[:, sl])
        attn = jnp.concatenate(outs, axis=-1) @ outw.T + outb

        def ln(t, g, b):
            mu = t.mean(-1, keepdims=True)
            var = ((t - mu) ** 2).mean(-1, keepdims=True)
            return (t - mu) / jnp.sqrt(var + LN_EPS) * g + b

        y = ln(xb + attn, g1, be1)
        h1 = jax.nn.gelu(y @ w1.T + b1, approximate=False)
        z = ln(y + (h1 @ w2.T + b2), g2, be2)
        return z

    out = jax.vmap(one)(x)
    return jnp.transpose(out, (1, 0, 2))


if __name__ == "__main__":
    key = jax.random.PRNGKey(0)
    k_x, k_p = jax.random.split(key)
    # src: (S, B, E) — PyTorch seq-first layout for nn.MultiheadAttention.
    src = jax.random.normal(k_x, (SEQ, BATCH, D_MODEL), jnp.float32)
    params = init_params(k_p)
    packed = pack_params(params)

    out = transformer_encoder_layer(src, packed)
    out = jax.block_until_ready(out)

    ref = reference(src, params)
    assert out.shape == (SEQ, BATCH, D_MODEL)
    # Intentional inference-grade numerics: bf16 MXU inputs, tanh-GELU and the
    # approx reciprocal stay well inside this band vs. the exact-erf reference.
    assert jnp.allclose(out, ref, atol=2e-2, rtol=2e-2), "mismatch vs reference"
    # TODO(synk): dropout layers are treated as identity (inference mode); training-mode
    # stochastic dropout is not implemented.
    print("KERNEL_OK")
</pallas_src>

<mosaic_0001>
module attributes {stable_mosaic.version = 11 : i64} {
  func.func @encoder_layer_kernel(%arg0: i32, %arg1: memref<16x32xf32, #tpu.memory_space<vmem>>, %arg2: memref<32x32xbf16, #tpu.memory_space<vmem>>, %arg3: memref<32x32xbf16, #tpu.memory_space<vmem>>, %arg4: memref<32x32xbf16, #tpu.memory_space<vmem>>, %arg5: memref<32x32xbf16, #tpu.memory_space<vmem>>, %arg6: memref<32x64xbf16, #tpu.memory_space<vmem>>, %arg7: memref<64x32xbf16, #tpu.memory_space<vmem>>, %arg8: memref<16x64xf32, #tpu.memory_space<vmem>>, %arg9: memref<16x32xf32, #tpu.memory_space<vmem>>) attributes {dimension_semantics = [#tpu.dimension_semantics<arbitrary>], iteration_bounds = array<i64: 1>, scalar_prefetch = 0 : i64, scratch_operands = 0 : i64, tpu.core_type = #tpu.core_type<tc>, window_params = [{pipeline_mode = #tpu.pipeline_mode<synchronous>, transform_indices = @transform_0, window_bounds = array<i64: 16, 32>}, {pipeline_mode = #tpu.pipeline_mode<synchronous>, transform_indices = @transform_1, window_bounds = array<i64: 32, 32>}, {pipeline_mode = #tpu.pipeline_mode<synchronous>, transform_indices = @transform_2, window_bounds = array<i64: 32, 32>}, {pipeline_mode = #tpu.pipeline_mode<synchronous>, transform_indices = @transform_3, window_bounds = array<i64: 32, 32>}, {pipeline_mode = #tpu.pipeline_mode<synchronous>, transform_indices = @transform_4, window_bounds = array<i64: 32, 32>}, {pipeline_mode = #tpu.pipeline_mode<synchronous>, transform_indices = @transform_5, window_bounds = array<i64: 32, 64>}, {pipeline_mode = #tpu.pipeline_mode<synchronous>, transform_indices = @transform_6, window_bounds = array<i64: 64, 32>}, {pipeline_mode = #tpu.pipeline_mode<synchronous>, transform_indices = @transform_7, window_bounds = array<i64: 16, 64>}, {pipeline_mode = #tpu.pipeline_mode<synchronous>, transform_indices = @transform_8, window_bounds = array<i64: 16, 32>}]} {
    %c0 = arith.constant 0 : index
    %c0_0 = arith.constant 0 : index
    %0 = vector.load %arg1[%c0, %c0_0] : memref<16x32xf32, #tpu.memory_space<vmem>>, vector<16x32xf32>
    %1 = arith.truncf %0 : vector<16x32xf32> to vector<16x32xbf16>
    %c0_1 = arith.constant 0 : index
    %c0_2 = arith.constant 0 : index
    %2 = vector.load %arg8[%c0_1, %c0_2] : memref<16x64xf32, #tpu.memory_space<vmem>>, vector<1x32xf32>
    %c1 = arith.constant 1 : index
    %c0_3 = arith.constant 0 : index
    %3 = vector.load %arg8[%c1, %c0_3] : memref<16x64xf32, #tpu.memory_space<vmem>>, vector<1x32xf32>
    %c2 = arith.constant 2 : index
    %c0_4 = arith.constant 0 : index
    %4 = vector.load %arg8[%c2, %c0_4] : memref<16x64xf32, #tpu.memory_space<vmem>>, vector<1x32xf32>
    %c3 = arith.constant 3 : index
    %c0_5 = arith.constant 0 : index
    %5 = vector.load %arg8[%c3, %c0_5] : memref<16x64xf32, #tpu.memory_space<vmem>>, vector<1x32xf32>
    %c4 = arith.constant 4 : index
    %c0_6 = arith.constant 0 : index
    %6 = vector.load %arg8[%c4, %c0_6] : memref<16x64xf32, #tpu.memory_space<vmem>>, vector<1x64xf32>
    %c5 = arith.constant 5 : index
    %c0_7 = arith.constant 0 : index
    %7 = vector.load %arg8[%c5, %c0_7] : memref<16x64xf32, #tpu.memory_space<vmem>>, vector<1x32xf32>
    %c6 = arith.constant 6 : index
    %c0_8 = arith.constant 0 : index
    %8 = vector.load %arg8[%c6, %c0_8] : memref<16x64xf32, #tpu.memory_space<vmem>>, vector<1x32xf32>
    %c7 = arith.constant 7 : index
    %c0_9 = arith.constant 0 : index
    %9 = vector.load %arg8[%c7, %c0_9] : memref<16x64xf32, #tpu.memory_space<vmem>>, vector<1x32xf32>
    %c8 = arith.constant 8 : index
    %c0_10 = arith.constant 0 : index
    %10 = vector.load %arg8[%c8, %c0_10] : memref<16x64xf32, #tpu.memory_space<vmem>>, vector<1x32xf32>
    %c9 = arith.constant 9 : index
    %c0_11 = arith.constant 0 : index
    %11 = vector.load %arg8[%c9, %c0_11] : memref<16x64xf32, #tpu.memory_space<vmem>>, vector<1x32xf32>
    %c0_12 = arith.constant 0 : index
    %c0_13 = arith.constant 0 : index
    %12 = vector.load %arg2[%c0_12, %c0_13] : memref<32x32xbf16, #tpu.memory_space<vmem>>, vector<32x32xbf16>
    %cst = arith.constant dense<0.000000e+00> : vector<16x32xf32>
    %13 = tpu.matmul %1, %12, %cst {dimension_numbers = #tpu.dot_dimension_numbers<[1], [0], [0], [1], [0, 0, 1, 1], [], []>} : vector<16x32xbf16>, vector<32x32xbf16>, vector<16x32xf32> -> vector<16x32xf32>
    %14 = vector.broadcast %2 : vector<1x32xf32> to vector<16x32xf32>
    %15 = arith.addf %13, %14 : vector<16x32xf32>
    %c0_14 = arith.constant 0 : index
    %c0_15 = arith.constant 0 : index
    %16 = vector.load %arg3[%c0_14, %c0_15] : memref<32x32xbf16, #tpu.memory_space<vmem>>, vector<32x32xbf16>
    %cst_16 = arith.constant dense<0.000000e+00> : vector<16x32xf32>
    %17 = tpu.matmul %1, %16, %cst_16 {dimension_numbers = #tpu.dot_dimension_numbers<[1], [0], [0], [1], [0, 0, 1, 1], [], []>} : vector<16x32xbf16>, vector<32x32xbf16>, vector<16x32xf32> -> vector<16x32xf32>
    %18 = vector.broadcast %3 : vector<1x32xf32> to vector<16x32xf32>
    %19 = arith.addf %17, %18 : vector<16x32xf32>
    %c0_17 = arith.constant 0 : index
    %c0_18 = arith.constant 0 : index
    %20 = vector.load %arg4[%c0_17, %c0_18] : memref<32x32xbf16, #tpu.memory_space<vmem>>, vector<32x32xbf16>
    %cst_19 = arith.constant dense<0.000000e+00> : vector<16x32xf32>
    %21 = tpu.matmul %1, %20, %cst_19 {dimension_numbers = #tpu.dot_dimension_numbers<[1], [0], [0], [1], [0, 0, 1, 1], [], []>} : vector<16x32xbf16>, vector<32x32xbf16>, vector<16x32xf32> -> vector<16x32xf32>
    %22 = vector.broadcast %4 : vector<1x32xf32> to vector<16x32xf32>
    %23 = arith.addf %21, %22 : vector<16x32xf32>
    %24 = arith.truncf %15 : vector<16x32xf32> to vector<16x32xbf16>
    %25 = arith.truncf %19 : vector<16x32xf32> to vector<16x32xbf16>
    %26 = arith.truncf %23 : vector<16x32xf32> to vector<16x32xbf16>
    %27 = tpu.iota {dimensions = array<i32: 0>} : vector<16x16xi32>
    %28 = tpu.iota {dimensions = array<i32: 1>} : vector<16x16xi32>
    %29 = arith.xori %27, %28 : vector<16x16xi32>
    %c1_i32 = arith.constant 1 : i32
    %30 = vector.broadcast %c1_i32 : i32 to vector<16x16xi32>
    %31 = arith.andi %29, %30 : vector<16x16xi32>
    %c0_i32 = arith.constant 0 : i32
    %32 = vector.broadcast %c0_i32 : i32 to vector<16x16xi32>
    %33 = arith.cmpi eq, %31, %32 : vector<16x16xi32>
    %34 = tpu.iota {dimensions = array<i32: 1>} : vector<1x32xi32>
    %cst_20 = arith.constant 0.000000e+00 : f32
    %35 = vector.broadcast %cst_20 : f32 to vector<16x32xf32>
    %c0_i32_21 = arith.constant 0 : i32
    %36 = vector.broadcast %c0_i32_21 : i32 to vector<1x32xi32>
    %37 = arith.cmpi sge, %34, %36 : vector<1x32xi32>
    %c8_i32 = arith.constant 8 : i32
    %38 = vector.broadcast %c8_i32 : i32 to vector<1x32xi32>
    %39 = arith.cmpi slt, %34, %38 : vector<1x32xi32>
    %40 = arith.andi %37, %39 : vector<1x32xi1>
    %41 = arith.extui %40 : vector<1x32xi1> to vector<1x32xi32>
    %42 = arith.sitofp %41 : vector<1x32xi32> to vector<1x32xf32>
    %43 = arith.truncf %42 : vector<1x32xf32> to vector<1x32xbf16>
    %44 = vector.broadcast %43 : vector<1x32xbf16> to vector<16x32xbf16>
    %45 = arith.mulf %25, %44 : vector<16x32xbf16>
    %46 = vector.broadcast %43 : vector<1x32xbf16> to vector<16x32xbf16>
    %47 = arith.mulf %26, %46 : vector<16x32xbf16>
    %cst_22 = arith.constant dense<0.000000e+00> : vector<16x16xf32>
    %48 = tpu.matmul %24, %45, %cst_22 {dimension_numbers = #tpu.dot_dimension_numbers<[1], [1], [0], [0], [0, 0, 1, 0], [], []>} : vector<16x32xbf16>, vector<16x32xbf16>, vector<16x16xf32> -> vector<16x16xf32>
    %cst_23 = arith.constant dense<0xFF800000> : vector<16xf32>
    %49 = vector.multi_reduction <maximumf>, %48, %cst_23 [1] : vector<16x16xf32> to vector<16xf32>
    %50 = vector.shape_cast %49 : vector<16xf32> to vector<16x1xf32>
    %51 = vector.broadcast %50 : vector<16x1xf32> to vector<16x16xf32>
    %52 = arith.subf %48, %51 : vector<16x16xf32>
    %53 = math.exp %52 : vector<16x16xf32>
    %cst_24 = arith.constant 0.000000e+00 : f32
    %54 = vector.broadcast %cst_24 : f32 to vector<16x16xf32>
    %55 = arith.select %33, %53, %54 : vector<16x16xi1>, vector<16x16xf32>
    %cst_25 = arith.constant dense<0.000000e+00> : vector<16xf32>
    %56 = vector.multi_reduction <add>, %55, %cst_25 [1] : vector<16x16xf32> to vector<16xf32>
    %57 = vector.shape_cast %56 : vector<16xf32> to vector<16x1xf32>
    %58 = tpu.reciprocal %57 {approx = true} : vector<16x1xf32> -> vector<16x1xf32>
    %59 = vector.broadcast %58 : vector<16x1xf32> to vector<16x16xf32>
    %60 = arith.mulf %55, %59 : vector<16x16xf32>
    %61 = arith.truncf %60 : vector<16x16xf32> to vector<16x16xbf16>
    %cst_26 = arith.constant dense<0.000000e+00> : vector<16x32xf32>
    %62 = tpu.matmul %61, %47, %cst_26 {dimension_numbers = #tpu.dot_dimension_numbers<[1], [0], [0], [1], [0, 0, 1, 1], [], []>} : vector<16x16xbf16>, vector<16x32xbf16>, vector<16x32xf32> -> vector<16x32xf32>
    %63 = arith.addf %35, %62 : vector<16x32xf32>
    %c8_i32_27 = arith.constant 8 : i32
    %64 = vector.broadcast %c8_i32_27 : i32 to vector<1x32xi32>
    %65 = arith.cmpi sge, %34, %64 : vector<1x32xi32>
    %c16_i32 = arith.constant 16 : i32
    %66 = vector.broadcast %c16_i32 : i32 to vector<1x32xi32>
    %67 = arith.cmpi slt, %34, %66 : vector<1x32xi32>
    %68 = arith.andi %65, %67 : vector<1x32xi1>
    %69 = arith.extui %68 : vector<1x32xi1> to vector<1x32xi32>
    %70 = arith.sitofp %69 : vector<1x32xi32> to vector<1x32xf32>
    %71 = arith.truncf %70 : vector<1x32xf32> to vector<1x32xbf16>
    %72 = vector.broadcast %71 : vector<1x32xbf16> to vector<16x32xbf16>
    %73 = arith.mulf %25, %72 : vector<16x32xbf16>
    %74 = vector.broadcast %71 : vector<1x32xbf16> to vector<16x32xbf16>
    %75 = arith.mulf %26, %74 : vector<16x32xbf16>
    %cst_28 = arith.constant dense<0.000000e+00> : vector<16x16xf32>
    %76 = tpu.matmul %24, %73, %cst_28 {dimension_numbers = #tpu.dot_dimension_numbers<[1], [1], [0], [0], [0, 0, 1, 0], [], []>} : vector<16x32xbf16>, vector<16x32xbf16>, vector<16x16xf32> -> vector<16x16xf32>
    %cst_29 = arith.constant dense<0xFF800000> : vector<16xf32>
    %77 = vector.multi_reduction <maximumf>, %76, %cst_29 [1] : vector<16x16xf32> to vector<16xf32>
    %78 = vector.shape_cast %77 : vector<16xf32> to vector<16x1xf32>
    %79 = vector.broadcast %78 : vector<16x1xf32> to vector<16x16xf32>
    %80 = arith.subf %76, %79 : vector<16x16xf32>
    %81 = math.exp %80 : vector<16x16xf32>
    %cst_30 = arith.constant 0.000000e+00 : f32
    %82 = vector.broadcast %cst_30 : f32 to vector<16x16xf32>
    %83 = arith.select %33, %81, %82 : vector<16x16xi1>, vector<16x16xf32>
    %cst_31 = arith.constant dense<0.000000e+00> : vector<16xf32>
    %84 = vector.multi_reduction <add>, %83, %cst_31 [1] : vector<16x16xf32> to vector<16xf32>
    %85 = vector.shape_cast %84 : vector<16xf32> to vector<16x1xf32>
    %86 = tpu.reciprocal %85 {approx = true} : vector<16x1xf32> -> vector<16x1xf32>
    %87 = vector.broadcast %86 : vector<16x1xf32> to vector<16x16xf32>
    %88 = arith.mulf %83, %87 : vector<16x16xf32>
    %89 = arith.truncf %88 : vector<16x16xf32> to vector<16x16xbf16>
    %cst_32 = arith.constant dense<0.000000e+00> : vector<16x32xf32>
    %90 = tpu.matmul %89, %75, %cst_32 {dimension_numbers = #tpu.dot_dimension_numbers<[1], [0], [0], [1], [0, 0, 1, 1], [], []>} : vector<16x16xbf16>, vector<16x32xbf16>, vector<16x32xf32> -> vector<16x32xf32>
    %91 = arith.addf %63, %90 : vector<16x32xf32>
    %c16_i32_33 = arith.constant 16 : i32
    %92 = vector.broadcast %c16_i32_33 : i32 to vector<1x32xi32>
    %93 = arith.cmpi sge, %34, %92 : vector<1x32xi32>
    %c24_i32 = arith.constant 24 : i32
    %94 = vector.broadcast %c24_i32 : i32 to vector<1x32xi32>
    %95 = arith.cmpi slt, %34, %94 : vector<1x32xi32>
    %96 = arith.andi %93, %95 : vector<1x32xi1>
    %97 = arith.extui %96 : vector<1x32xi1> to vector<1x32xi32>
    %98 = arith.sitofp %97 : vector<1x32xi32> to vector<1x32xf32>
    %99 = arith.truncf %98 : vector<1x32xf32> to vector<1x32xbf16>
    %100 = vector.broadcast %99 : vector<1x32xbf16> to vector<16x32xbf16>
    %101 = arith.mulf %25, %100 : vector<16x32xbf16>
    %102 = vector.broadcast %99 : vector<1x32xbf16> to vector<16x32xbf16>
    %103 = arith.mulf %26, %102 : vector<16x32xbf16>
    %cst_34 = arith.constant dense<0.000000e+00> : vector<16x16xf32>
    %104 = tpu.matmul %24, %101, %cst_34 {dimension_numbers = #tpu.dot_dimension_numbers<[1], [1], [0], [0], [0, 0, 1, 0], [], []>} : vector<16x32xbf16>, vector<16x32xbf16>, vector<16x16xf32> -> vector<16x16xf32>
    %cst_35 = arith.constant dense<0xFF800000> : vector<16xf32>
    %105 = vector.multi_reduction <maximumf>, %104, %cst_35 [1] : vector<16x16xf32> to vector<16xf32>
    %106 = vector.shape_cast %105 : vector<16xf32> to vector<16x1xf32>
    %107 = vector.broadcast %106 : vector<16x1xf32> to vector<16x16xf32>
    %108 = arith.subf %104, %107 : vector<16x16xf32>
    %109 = math.exp %108 : vector<16x16xf32>
    %cst_36 = arith.constant 0.000000e+00 : f32
    %110 = vector.broadcast %cst_36 : f32 to vector<16x16xf32>
    %111 = arith.select %33, %109, %110 : vector<16x16xi1>, vector<16x16xf32>
    %cst_37 = arith.constant dense<0.000000e+00> : vector<16xf32>
    %112 = vector.multi_reduction <add>, %111, %cst_37 [1] : vector<16x16xf32> to vector<16xf32>
    %113 = vector.shape_cast %112 : vector<16xf32> to vector<16x1xf32>
    %114 = tpu.reciprocal %113 {approx = true} : vector<16x1xf32> -> vector<16x1xf32>
    %115 = vector.broadcast %114 : vector<16x1xf32> to vector<16x16xf32>
    %116 = arith.mulf %111, %115 : vector<16x16xf32>
    %117 = arith.truncf %116 : vector<16x16xf32> to vector<16x16xbf16>
    %cst_38 = arith.constant dense<0.000000e+00> : vector<16x32xf32>
    %118 = tpu.matmul %117, %103, %cst_38 {dimension_numbers = #tpu.dot_dimension_numbers<[1], [0], [0], [1], [0, 0, 1, 1], [], []>} : vector<16x16xbf16>, vector<16x32xbf16>, vector<16x32xf32> -> vector<16x32xf32>
    %119 = arith.addf %91, %118 : vector<16x32xf32>
    %c24_i32_39 = arith.constant 24 : i32
    %120 = vector.broadcast %c24_i32_39 : i32 to vector<1x32xi32>
    %121 = arith.cmpi sge, %34, %120 : vector<1x32xi32>
    %c32_i32 = arith.constant 32 : i32
    %122 = vector.broadcast %c32_i32 : i32 to vector<1x32xi32>
    %123 = arith.cmpi slt, %34, %122 : vector<1x32xi32>
    %124 = arith.andi %121, %123 : vector<1x32xi1>
    %125 = arith.extui %124 : vector<1x32xi1> to vector<1x32xi32>
    %126 = arith.sitofp %125 : vector<1x32xi32> to vector<1x32xf32>
    %127 = arith.truncf %126 : vector<1x32xf32> to vector<1x32xbf16>
    %128 = vector.broadcast %127 : vector<1x32xbf16> to vector<16x32xbf16>
    %129 = arith.mulf %25, %128 : vector<16x32xbf16>
    %130 = vector.broadcast %127 : vector<1x32xbf16> to vector<16x32xbf16>
    %131 = arith.mulf %26, %130 : vector<16x32xbf16>
    %cst_40 = arith.constant dense<0.000000e+00> : vector<16x16xf32>
    %132 = tpu.matmul %24, %129, %cst_40 {dimension_numbers = #tpu.dot_dimension_numbers<[1], [1], [0], [0], [0, 0, 1, 0], [], []>} : vector<16x32xbf16>, vector<16x32xbf16>, vector<16x16xf32> -> vector<16x16xf32>
    %cst_41 = arith.constant dense<0xFF800000> : vector<16xf32>
    %133 = vector.multi_reduction <maximumf>, %132, %cst_41 [1] : vector<16x16xf32> to vector<16xf32>
    %134 = vector.shape_cast %133 : vector<16xf32> to vector<16x1xf32>
    %135 = vector.broadcast %134 : vector<16x1xf32> to vector<16x16xf32>
    %136 = arith.subf %132, %135 : vector<16x16xf32>
    %137 = math.exp %136 : vector<16x16xf32>
    %cst_42 = arith.constant 0.000000e+00 : f32
    %138 = vector.broadcast %cst_42 : f32 to vector<16x16xf32>
    %139 = arith.select %33, %137, %138 : vector<16x16xi1>, vector<16x16xf32>
    %cst_43 = arith.constant dense<0.000000e+00> : vector<16xf32>
    %140 = vector.multi_reduction <add>, %139, %cst_43 [1] : vector<16x16xf32> to vector<16xf32>
    %141 = vector.shape_cast %140 : vector<16xf32> to vector<16x1xf32>
    %142 = tpu.reciprocal %141 {approx = true} : vector<16x1xf32> -> vector<16x1xf32>
    %143 = vector.broadcast %142 : vector<16x1xf32> to vector<16x16xf32>
    %144 = arith.mulf %139, %143 : vector<16x16xf32>
    %145 = arith.truncf %144 : vector<16x16xf32> to vector<16x16xbf16>
    %cst_44 = arith.constant dense<0.000000e+00> : vector<16x32xf32>
    %146 = tpu.matmul %145, %131, %cst_44 {dimension_numbers = #tpu.dot_dimension_numbers<[1], [0], [0], [1], [0, 0, 1, 1], [], []>} : vector<16x16xbf16>, vector<16x32xbf16>, vector<16x32xf32> -> vector<16x32xf32>
    %147 = arith.addf %119, %146 : vector<16x32xf32>
    %148 = arith.truncf %147 : vector<16x32xf32> to vector<16x32xbf16>
    %c0_45 = arith.constant 0 : index
    %c0_46 = arith.constant 0 : index
    %149 = vector.load %arg5[%c0_45, %c0_46] : memref<32x32xbf16, #tpu.memory_space<vmem>>, vector<32x32xbf16>
    %cst_47 = arith.constant dense<0.000000e+00> : vector<16x32xf32>
    %150 = tpu.matmul %148, %149, %cst_47 {dimension_numbers = #tpu.dot_dimension_numbers<[1], [0], [0], [1], [0, 0, 1, 1], [], []>} : vector<16x32xbf16>, vector<32x32xbf16>, vector<16x32xf32> -> vector<16x32xf32>
    %151 = vector.broadcast %5 : vector<1x32xf32> to vector<16x32xf32>
    %152 = arith.addf %150, %151 : vector<16x32xf32>
    %153 = arith.addf %0, %152 : vector<16x32xf32>
    %cst_48 = arith.constant dense<0.000000e+00> : vector<16xf32>
    %154 = vector.multi_reduction <add>, %153, %cst_48 [1] : vector<16x32xf32> to vector<16xf32>
    %155 = vector.shape_cast %154 : vector<16xf32> to vector<16x1xf32>
    %cst_49 = arith.constant 3.200000e+01 : f32
    %156 = vector.broadcast %cst_49 : f32 to vector<16x1xf32>
    %157 = arith.divf %155, %156 : vector<16x1xf32>
    %158 = vector.broadcast %157 : vector<16x1xf32> to vector<16x32xf32>
    %159 = arith.subf %153, %158 : vector<16x32xf32>
    %160 = arith.mulf %159, %159 : vector<16x32xf32>
    %cst_50 = arith.constant dense<0.000000e+00> : vector<16xf32>
    %161 = vector.multi_reduction <add>, %160, %cst_50 [1] : vector<16x32xf32> to vector<16xf32>
    %162 = vector.shape_cast %161 : vector<16xf32> to vector<16x1xf32>
    %cst_51 = arith.constant 3.200000e+01 : f32
    %163 = vector.broadcast %cst_51 : f32 to vector<16x1xf32>
    %164 = arith.divf %162, %163 : vector<16x1xf32>
    %cst_52 = arith.constant 9.99999974E-6 : f32
    %165 = vector.broadcast %cst_52 : f32 to vector<16x1xf32>
    %166 = arith.addf %164, %165 : vector<16x1xf32>
    %167 = math.rsqrt %166 : vector<16x1xf32>
    %168 = vector.broadcast %167 : vector<16x1xf32> to vector<16x32xf32>
    %169 = arith.mulf %159, %168 : vector<16x32xf32>
    %170 = vector.broadcast %8 : vector<1x32xf32> to vector<16x32xf32>
    %171 = arith.mulf %169, %170 : vector<16x32xf32>
    %172 = vector.broadcast %9 : vector<1x32xf32> to vector<16x32xf32>
    %173 = arith.addf %171, %172 : vector<16x32xf32>
    %174 = arith.truncf %173 : vector<16x32xf32> to vector<16x32xbf16>
    %c0_53 = arith.constant 0 : index
    %c0_54 = arith.constant 0 : index
    %175 = vector.load %arg6[%c0_53, %c0_54] : memref<32x64xbf16, #tpu.memory_space<vmem>>, vector<32x64xbf16>
    %cst_55 = arith.constant dense<0.000000e+00> : vector<16x64xf32>
    %176 = tpu.matmul %174, %175, %cst_55 {dimension_numbers = #tpu.dot_dimension_numbers<[1], [0], [0], [1], [0, 0, 1, 1], [], []>} : vector<16x32xbf16>, vector<32x64xbf16>, vector<16x64xf32> -> vector<16x64xf32>
    %177 = vector.broadcast %6 : vector<1x64xf32> to vector<16x64xf32>
    %178 = arith.addf %176, %177 : vector<16x64xf32>
    %cst_56 = arith.constant 5.000000e-01 : f32
    %179 = vector.broadcast %cst_56 : f32 to vector<16x64xf32>
    %180 = arith.mulf %179, %178 : vector<16x64xf32>
    %cst_57 = arith.constant 4.471500e-02 : f32
    %181 = vector.broadcast %cst_57 : f32 to vector<16x64xf32>
    %182 = arith.mulf %181, %178 : vector<16x64xf32>
    %183 = arith.mulf %182, %178 : vector<16x64xf32>
    %184 = arith.mulf %183, %178 : vector<16x64xf32>
    %185 = arith.addf %178, %184 : vector<16x64xf32>
    %cst_58 = arith.constant 0.797884583 : f32
    %186 = vector.broadcast %cst_58 : f32 to vector<16x64xf32>
    %187 = arith.mulf %186, %185 : vector<16x64xf32>
    %188 = math.tanh %187 : vector<16x64xf32>
    %cst_59 = arith.constant 1.000000e+00 : f32
    %189 = vector.broadcast %cst_59 : f32 to vector<16x64xf32>
    %190 = arith.addf %189, %188 : vector<16x64xf32>
    %191 = arith.mulf %180, %190 : vector<16x64xf32>
    %192 = arith.truncf %191 : vector<16x64xf32> to vector<16x64xbf16>
    %c0_60 = arith.constant 0 : index
    %c0_61 = arith.constant 0 : index
    %193 = vector.load %arg7[%c0_60, %c0_61] : memref<64x32xbf16, #tpu.memory_space<vmem>>, vector<64x32xbf16>
    %cst_62 = arith.constant dense<0.000000e+00> : vector<16x32xf32>
    %194 = tpu.matmul %192, %193, %cst_62 {dimension_numbers = #tpu.dot_dimension_numbers<[1], [0], [0], [1], [0, 0, 1, 1], [], []>} : vector<16x64xbf16>, vector<64x32xbf16>, vector<16x32xf32> -> vector<16x32xf32>
    %195 = vector.broadcast %7 : vector<1x32xf32> to vector<16x32xf32>
    %196 = arith.addf %194, %195 : vector<16x32xf32>
    %197 = arith.addf %173, %196 : vector<16x32xf32>
    %cst_63 = arith.constant dense<0.000000e+00> : vector<16xf32>
    %198 = vector.multi_reduction <add>, %197, %cst_63 [1] : vector<16x32xf32> to vector<16xf32>
    %199 = vector.shape_cast %198 : vector<16xf32> to vector<16x1xf32>
    %cst_64 = arith.constant 3.200000e+01 : f32
    %200 = vector.broadcast %cst_64 : f32 to vector<16x1xf32>
    %201 = arith.divf %199, %200 : vector<16x1xf32>
    %202 = vector.broadcast %201 : vector<16x1xf32> to vector<16x32xf32>
    %203 = arith.subf %197, %202 : vector<16x32xf32>
    %204 = arith.mulf %203, %203 : vector<16x32xf32>
    %cst_65 = arith.constant dense<0.000000e+00> : vector<16xf32>
    %205 = vector.multi_reduction <add>, %204, %cst_65 [1] : vector<16x32xf32> to vector<16xf32>
    %206 = vector.shape_cast %205 : vector<16xf32> to vector<16x1xf32>
    %cst_66 = arith.constant 3.200000e+01 : f32
    %207 = vector.broadcast %cst_66 : f32 to vector<16x1xf32>
    %208 = arith.divf %206, %207 : vector<16x1xf32>
    %cst_67 = arith.constant 9.99999974E-6 : f32
    %209 = vector.broadcast %cst_67 : f32 to vector<16x1xf32>
    %210 = arith.addf %208, %209 : vector<16x1xf32>
    %211 = math.rsqrt %210 : vector<16x1xf32>
    %212 = vector.broadcast %211 : vector<16x1xf32> to vector<16x32xf32>
    %213 = arith.mulf %203, %212 : vector<16x32xf32>
    %214 = vector.broadcast %10 : vector<1x32xf32> to vector<16x32xf32>
    %215 = arith.mulf %213, %214 : vector<16x32xf32>
    %216 = vector.broadcast %11 : vector<1x32xf32> to vector<16x32xf32>
    %217 = arith.addf %215, %216 : vector<16x32xf32>
    %c0_68 = arith.constant 0 : index
    %c0_69 = arith.constant 0 : index
    %218 = vector.load %arg9[%c0_68, %c0_69] : memref<16x32xf32, #tpu.memory_space<vmem>>, vector<16x32xf32>
    tpu.vector_store %arg9[%c0_68, %c0_69], %217 {strides = array<i32>} : memref<16x32xf32, #tpu.memory_space<vmem>>, vector<16x32xf32>,
    return
  }
  func.func @transform_0(%arg0: i32) -> (i32, i32) {
    %c0_i32 = arith.constant 0 : i32
    %c0_i32_0 = arith.constant 0 : i32
    %c0_i32_1 = arith.constant 0 : i32
    return %c0_i32, %c0_i32_0 : i32, i32
  }
  func.func @transform_1(%arg0: i32) -> (i32, i32) {
    %c0_i32 = arith.constant 0 : i32
    %c0_i32_0 = arith.constant 0 : i32
    %c0_i32_1 = arith.constant 0 : i32
    return %c0_i32, %c0_i32_0 : i32, i32
  }
  func.func @transform_2(%arg0: i32) -> (i32, i32) {
    %c0_i32 = arith.constant 0 : i32
    %c0_i32_0 = arith.constant 0 : i32
    %c0_i32_1 = arith.constant 0 : i32
    return %c0_i32, %c0_i32_0 : i32, i32
  }
  func.func @transform_3(%arg0: i32) -> (i32, i32) {
    %c0_i32 = arith.constant 0 : i32
    %c0_i32_0 = arith.constant 0 : i32
    %c0_i32_1 = arith.constant 0 : i32
    return %c0_i32, %c0_i32_0 : i32, i32
  }
  func.func @transform_4(%arg0: i32) -> (i32, i32) {
    %c0_i32 = arith.constant 0 : i32
    %c0_i32_0 = arith.constant 0 : i32
    %c0_i32_1 = arith.constant 0 : i32
    return %c0_i32, %c0_i32_0 : i32, i32
  }
  func.func @transform_5(%arg0: i32) -> (i32, i32) {
    %c0_i32 = arith.constant 0 : i32
    %c0_i32_0 = arith.constant 0 : i32
    %c0_i32_1 = arith.constant 0 : i32
    return %c0_i32, %c0_i32_0 : i32, i32
  }
  func.func @transform_6(%arg0: i32) -> (i32, i32) {
    %c0_i32 = arith.constant 0 : i32
    %c0_i32_0 = arith.constant 0 : i32
    %c0_i32_1 = arith.constant 0 : i32
    return %c0_i32, %c0_i32_0 : i32, i32
  }
  func.func @transform_7(%arg0: i32) -> (i32, i32) {
    %c0_i32 = arith.constant 0 : i32
    %c0_i32_0 = arith.constant 0 : i32
    %c0_i32_1 = arith.constant 0 : i32
    return %c0_i32, %c0_i32_0 : i32, i32
  }
  func.func @transform_8(%arg0: i32) -> (i32, i32) {
    %c0_i32 = arith.constant 0 : i32
    %c0_i32_0 = arith.constant 0 : i32
    %c0_i32_1 = arith.constant 0 : i32
    return %c0_i32, %c0_i32_0 : i32, i32
  }
}

</mosaic_0001>

<llo_original>
// kernel: tpu_custom_call.1
$region0: #{tpu_custom_call.1}
  #allocation0 [shape = 'u32[]', space=smem, size = 0x4, offset = 0x4, fixed_abs, tag = 'smem constant byte address 0x4 - core index']
  #allocation1 [shape = 'u32[144,128]{1,0:T(1,128)}', space=vmem, size = 0x12000, scoped, tag = 'internal scratch']
  %s0 = inlined_call_operand.vmem [shape: f32[16,32], index: 0, kind: input, shape index: {}]
  %s1 = inlined_call_operand.vmem [shape: bf16[32,32], index: 1, kind: input, shape index: {}]
  %s2 = inlined_call_operand.vmem [shape: bf16[32,32], index: 2, kind: input, shape index: {}]
  %s3 = inlined_call_operand.hbm [shape: bf16[32,32], index: 3, kind: input, shape index: {}]
  %s4 = inlined_call_operand.hbm [shape: bf16[32,32], index: 4, kind: input, shape index: {}]
  %s5 = inlined_call_operand.hbm [shape: bf16[32,64], index: 5, kind: input, shape index: {}]
  %s6 = inlined_call_operand.vmem [shape: bf16[64,32], index: 6, kind: input, shape index: {}]
  %s7 = inlined_call_operand.hbm [shape: f32[16,64], index: 7, kind: input, shape index: {}]
  %s8 = inlined_call_operand.hbm [shape: f32[16,32], index: 8, kind: output, shape index: {}]
  %s9 = sld [smem:[#allocation0]]
  $region58: #{tpu_custom_call.1} parent=0
    _
  %s11 = ssub.s32 1, %s9
  %s12 = scalar_select 0, %s11, %s9
  $region1: #{tpu_custom_call.1} parent=0
    #allocation2 [shape = 'u8[8192]{0}', space=vmem, size = 0x2000, scoped, tag = 'input window, operand 3, single buffered']
    #allocation3 [shape = 's32[1]{0}', space=sflag, size = 0x4, scoped, tag = 'scoped memory for tpu_custom_call.1']
    #allocation4 [shape = 's32[1]{0}', space=sflag, size = 0x4, scoped, tag = 'scoped memory for tpu_custom_call.1']
    #allocation5 [shape = 'u8[8192]{0}', space=vmem, size = 0x2000, scoped, tag = 'input window, operand 4, single buffered']
    #allocation6 [shape = 's32[1]{0}', space=sflag, size = 0x4, scoped, tag = 'scoped memory for tpu_custom_call.1']
    #allocation7 [shape = 'u8[8192]{0}', space=vmem, size = 0x2000, scoped, tag = 'input window, operand 5, single buffered']
    #allocation8 [shape = 'u8[8192]{0}', space=vmem, size = 0x2000, scoped, tag = 'input window, operand 7, single buffered']
    #allocation9 [shape = 's32[1]{0}', space=sflag, size = 0x4, scoped, tag = 'scoped memory for tpu_custom_call.1']
    #allocation10 [shape = 'u8[8192]{0}', space=vmem, size = 0x2000, scoped, tag = 'output window, operand 0, single buffered']
    %13 = vsyncpa [#allocation3], 0
    %14 = vsyncpa [#allocation6], 0
    %15 = vsyncpa [#allocation9], 0
    %16 = vsyncpa [#allocation4], 0
    // Predicated region
    $region2: #{tpu_custom_call.1} parent=1 // pred_check
      _
    $region3: #{tpu_custom_call.1} parent=1 // pred_check_branch
      %18 = sbr.rel (0) target = $region5
    $region4: #{tpu_custom_call.1} parent=1 // pred_region
      _
    $region5: #{tpu_custom_call.1} parent=1 // pred_fallthru
      _
    // Predicated region
    $region6: #{tpu_custom_call.1} parent=1 // pred_check
      _
    $region7: #{tpu_custom_call.1} parent=1 // pred_check_branch
      %20 = sbr.rel (0) target = $region9
    $region8: #{tpu_custom_call.1} parent=1 // pred_region
      _
    $region9: #{tpu_custom_call.1} parent=1 // pred_fallthru
      _
    // Predicated region
    $region10: #{tpu_custom_call.1} parent=1 // pred_check
      _
    $region11: #{tpu_custom_call.1} parent=1 // pred_check_branch
      %22 = sbr.rel (0) target = $region13
    $region12: #{tpu_custom_call.1} parent=1 // pred_region
      _
    $region13: #{tpu_custom_call.1} parent=1 // pred_fallthru
      _
    // Predicated region
    $region14: #{tpu_custom_call.1} parent=1 // pred_check
      _
    $region15: #{tpu_custom_call.1} parent=1 // pred_check_branch
      %24 = sbr.rel (0) target = $region17
    $region16: #{tpu_custom_call.1} parent=1 // pred_region
      %s26 = ssub.s32 256, 256
      %27 = vsyncadd [#allocation3], %s26
      %s28 = sshll.u32 [#allocation2], 4
      %s29 = int_to_ptr.vmem [resolvable:$true] %s28
      %34 = dma.hbm_to_vmem [thread:$0]  %s3, 256, %s29, [#allocation3], 64, 64, 4
    $region17: #{tpu_custom_call.1} parent=1 // pred_fallthru
      _
    // Predicated region
    $region18: #{tpu_custom_call.1} parent=1 // pred_check
      _
    $region19: #{tpu_custom_call.1} parent=1 // pred_check_branch
      %36 = sbr.rel (0) target = $region21
    $region20: #{tpu_custom_call.1} parent=1 // pred_region
      %s38 = ssub.s32 256, 256
      %39 = vsyncadd [#allocation6], %s38
      %s40 = sshll.u32 [#allocation5], 4
      %s41 = int_to_ptr.vmem [resolvable:$true] %s40
      %46 = dma.hbm_to_vmem [thread:$0]  %s4, 256, %s41, [#allocation6], 64, 64, 4
    $region21: #{tpu_custom_call.1} parent=1 // pred_fallthru
      _
    // Predicated region
    $region22: #{tpu_custom_call.1} parent=1 // pred_check
      _
    $region23: #{tpu_custom_call.1} parent=1 // pred_check_branch
      %48 = sbr.rel (0) target = $region25
    $region24: #{tpu_custom_call.1} parent=1 // pred_region
      %s50 = ssub.s32 256, 256
      %51 = vsyncadd [#allocation6], %s50
      %s52 = sshll.u32 [#allocation7], 4
      %s53 = int_to_ptr.vmem [resolvable:$true] %s52
      %58 = dma.hbm_to_vmem [thread:$0]  %s5, 256, %s53, [#allocation6], 64, 64, 4
    $region25: #{tpu_custom_call.1} parent=1 // pred_fallthru
      _
    // Predicated region
    $region26: #{tpu_custom_call.1} parent=1 // pred_check
      _
    $region27: #{tpu_custom_call.1} parent=1 // pred_check_branch
      %60 = sbr.rel (0) target = $region29
    $region28: #{tpu_custom_call.1} parent=1 // pred_region
      _
    $region29: #{tpu_custom_call.1} parent=1 // pred_fallthru
      _
    // Predicated region
    $region30: #{tpu_custom_call.1} parent=1 // pred_check
      _
    $region31: #{tpu_custom_call.1} parent=1 // pred_check_branch
      %62 = sbr.rel (0) target = $region33
    $region32: #{tpu_custom_call.1} parent=1 // pred_region
      %s64 = ssub.s32 256, 256
      %65 = vsyncadd [#allocation9], %s64
      %s66 = sshll.u32 [#allocation8], 4
      %s67 = int_to_ptr.vmem [resolvable:$true] %s66
      %72 = dma.hbm_to_vmem [thread:$0]  %s7, 256, %s67, [#allocation9], 128, 128, 8
    $region33: #{tpu_custom_call.1} parent=1 // pred_fallthru
      _
    // Predicated region
    $region34: #{tpu_custom_call.1} parent=1 // pred_check
      _
    $region35: #{tpu_custom_call.1} parent=1 // pred_check_branch
      %74 = sbr.rel (0) target = $region37
    $region36: #{tpu_custom_call.1} parent=1 // pred_region
      %75 = dma.done [#allocation3], 256
    $region37: #{tpu_custom_call.1} parent=1 // pred_fallthru
      _
    // Predicated region
    $region38: #{tpu_custom_call.1} parent=1 // pred_check
      _
    $region39: #{tpu_custom_call.1} parent=1 // pred_check_branch
      %77 = sbr.rel (0) target = $region41
    $region40: #{tpu_custom_call.1} parent=1 // pred_region
      %78 = dma.done [#allocation6], 256
    $region41: #{tpu_custom_call.1} parent=1 // pred_fallthru
      _
    // Predicated region
    $region42: #{tpu_custom_call.1} parent=1 // pred_check
      _
    $region43: #{tpu_custom_call.1} parent=1 // pred_check_branch
      %80 = sbr.rel (0) target = $region45
    $region44: #{tpu_custom_call.1} parent=1 // pred_region
      %81 = dma.done [#allocation6], 256
    $region45: #{tpu_custom_call.1} parent=1 // pred_fallthru
      _
    // Predicated region
    $region46: #{tpu_custom_call.1} parent=1 // pred_check
      _
    $region47: #{tpu_custom_call.1} parent=1 // pred_check_branch
      %83 = sbr.rel (0) target = $region49
    $region48: #{tpu_custom_call.1} parent=1 // pred_region
      %84 = dma.done [#allocation9], 256
    $region49: #{tpu_custom_call.1} parent=1 // pred_fallthru
      _
    %v86 = vld [vmem:[%s0] sm:$0xff]
    %v87 = vld [vmem:[%s0 + $0x8] sm:$0xff]
    %v88 = vpack.c.bf16 %v87, %v86
    %v89 = vld [vmem:[#allocation8] sm:$0x1]
    %v90 = vld [vmem:[#allocation8 + $0x1] sm:$0x1]
    %v91 = vld [vmem:[#allocation8 + $0x2] sm:$0x1]
    %v92 = vld [vmem:[#allocation8 + $0x3] sm:$0x1]
    %v93 = vld [vmem:[#allocation8 + $0x4] sm:$0x1]
    %v94 = vld [vmem:[#allocation8 + $0x5] sm:$0x1]
    %v95 = vld [vmem:[#allocation8 + $0x6] sm:$0x1]
    %v96 = vld [vmem:[#allocation8 + $0x7] sm:$0x1]
    %v97 = vld [vmem:[#allocation8 + $0x8] sm:$0x1]
    %v98 = vld [vmem:[#allocation8 + $0x9] sm:$0x1]
    %v99 = vld [vmem:[%s1] sm:$0xf]
    %v100 = vld [vmem:[%s1 + $0x4] sm:$0xf]
    %v101 = vld [vmem:[%s1 + $0x8] sm:$0xf]
    %v102 = vld [vmem:[%s1 + $0xc] sm:$0xf]
    %v103 = vlaneseq
    %v104 = vshrl.u32 %v103, 7
    %v105 = vsub.s32 0, %v104
    %v106 = vrot.slane %v89, %v105
    %v111 = vunpack.c.l.b16 %v99
    %v112 = vunpack.c.l.b16 %v100
    %v113 = vunpack.c.l.b16 %v101
    %v114 = vunpack.c.l.b16 %v102
    %v115 = vpack.c.b16 %v112, %v111
    %v116 = vpack.c.b16 %v114, %v113
    %vm119 = vcmask 261120
    %v121 = vsel %vm119, %v88, 0
    %123 = vmatprep.subr.bf16.mxu0 0
    %124 = vmatpush1.bf16.msra.mxu0 %v115
    %125 = vmatprep.subr.bf16.mxu0 0
    %126 = vmatpush1.bf16.msra.mxu0 %v116
    %127 = vmatprep.subr.bf16.mxu0 0
    %128 = vmatpush1.bf16.msra.mxu0 0
    %129 = vmatprep.subr.bf16.mxu0 0
    %130 = vmatpush1.bf16.msra.mxu0 0
    %131 = vmatprep.subr.bf16.mxu0 0
    %132 = vmatpush1.bf16.msra.mxu0 0
    %133 = vmatprep.subr.bf16.mxu0 0
    %134 = vmatpush1.bf16.msra.mxu0 0
    %135 = vmatprep.subr.bf16.mxu0 0
    %136 = vmatpush1.bf16.msra.mxu0 0
    %137 = vmatprep.subr.bf16.mxu0 0
    %138 = vmatpush1.bf16.msra.mxu0 0
    %139 = vmatprep.subr.bf16.mxu0 0
    %140 = vmatpush1.bf16.msra.mxu0 0
    %141 = vmatprep.subr.bf16.mxu0 0
    %142 = vmatpush1.bf16.msra.mxu0 0
    %143 = vmatprep.subr.bf16.mxu0 0
    %144 = vmatpush1.bf16.msra.mxu0 0
    %145 = vmatprep.subr.bf16.mxu0 0
    %146 = vmatpush1.bf16.msra.mxu0 0
    %147 = vmatprep.subr.bf16.mxu0 0
    %148 = vmatpush1.bf16.msra.mxu0 0
    %149 = vmatprep.subr.bf16.mxu0 0
    %150 = vmatpush1.bf16.msra.mxu0 0
    %151 = vmatprep.subr.bf16.mxu0 0
    %152 = vmatpush1.bf16.msra.mxu0 0
    %153 = vmatprep.subr.bf16.mxu0 0
    %154 = vmatpush1.bf16.msra.mxu0 0
    %155 = vmatprep.mubr.bf16.mxu0 0
    %156 = vmatmul.mubr.bf16.gmra.mrb[0].mxu0 %v121
    %v157 = vpop.f32.mrb[0].mxu0
    %v158 = vadd.f32 %v106, %v157
    %v159 = vpop.f32.mrb[0].mxu0
    %v160 = vpop.f32.mrb[0].mxu0
    %v161 = vadd.f32 %v106, %v160
    %v162 = vpop.f32.mrb[0].mxu0
    %163 = vdwg.mxu0
    %v164 = vld [vmem:[%s2] sm:$0xf]
    %v165 = vld [vmem:[%s2 + $0x4] sm:$0xf]
    %v166 = vld [vmem:[%s2 + $0x8] sm:$0xf]
    %v167 = vld [vmem:[%s2 + $0xc] sm:$0xf]
    %v168 = vlaneseq
    %v169 = vshrl.u32 %v168, 7
    %v170 = vsub.s32 0, %v169
    %v171 = vrot.slane %v90, %v170
    %v176 = vunpack.c.l.b16 %v164
    %v177 = vunpack.c.l.b16 %v165
    %v178 = vunpack.c.l.b16 %v166
    %v179 = vunpack.c.l.b16 %v167
    %v180 = vpack.c.b16 %v177, %v176
    %v181 = vpack.c.b16 %v179, %v178
    %184 = vmatprep.subr.bf16.mxu0 0
    %185 = vmatpush1.bf16.msra.mxu0 %v180
    %186 = vmatprep.subr.bf16.mxu0 0
    %187 = vmatpush1.bf16.msra.mxu0 %v181
    %188 = vmatprep.subr.bf16.mxu0 0
    %189 = vmatpush1.bf16.msra.mxu0 0
    %190 = vmatprep.subr.bf16.mxu0 0
    %191 = vmatpush1.bf16.msra.mxu0 0
    %192 = vmatprep.subr.bf16.mxu0 0
    %193 = vmatpush1.bf16.msra.mxu0 0
    %194 = vmatprep.subr.bf16.mxu0 0
    %195 = vmatpush1.bf16.msra.mxu0 0
    %196 = vmatprep.subr.bf16.mxu0 0
    %197 = vmatpush1.bf16.msra.mxu0 0
    %198 = vmatprep.subr.bf16.mxu0 0
    %199 = vmatpush1.bf16.msra.mxu0 0
    %200 = vmatprep.subr.bf16.mxu0 0
    %201 = vmatpush1.bf16.msra.mxu0 0
    %202 = vmatprep.subr.bf16.mxu0 0
    %203 = vmatpush1.bf16.msra.mxu0 0
    %204 = vmatprep.subr.bf16.mxu0 0
    %205 = vmatpush1.bf16.msra.mxu0 0
    %206 = vmatprep.subr.bf16.mxu0 0
    %207 = vmatpush1.bf16.msra.mxu0 0
    %208 = vmatprep.subr.bf16.mxu0 0
    %209 = vmatpush1.bf16.msra.mxu0 0
    %210 = vmatprep.subr.bf16.mxu0 0
    %211 = vmatpush1.bf16.msra.mxu0 0
    %212 = vmatprep.subr.bf16.mxu0 0
    %213 = vmatpush1.bf16.msra.mxu0 0
    %214 = vmatprep.subr.bf16.mxu0 0
    %215 = vmatpush1.bf16.msra.mxu0 0
    %216 = vmatprep.mubr.bf16.mxu0 0
    %217 = vmatmul.mubr.bf16.gmra.mrb[0].mxu0 %v121
    %v218 = vpop.f32.mrb[0].mxu0
    %v219 = vadd.f32 %v171, %v218
    %v220 = vpop.f32.mrb[0].mxu0
    %v221 = vpop.f32.mrb[0].mxu0
    %v222 = vadd.f32 %v171, %v221
    %v223 = vpop.f32.mrb[0].mxu0
    %224 = vdwg.mxu0
    %v225 = vld [vmem:[#allocation2] sm:$0xf]
    %v226 = vld [vmem:[#allocation2 + $0x4] sm:$0xf]
    %v227 = vld [vmem:[#allocation2 + $0x8] sm:$0xf]
    %v228 = vld [vmem:[#allocation2 + $0xc] sm:$0xf]
    %v229 = vlaneseq
    %v230 = vshrl.u32 %v229, 7
    %v231 = vsub.s32 0, %v230
    %v232 = vrot.slane %v91, %v231
    %v237 = vunpack.c.l.b16 %v225
    %v238 = vunpack.c.l.b16 %v226
    %v239 = vunpack.c.l.b16 %v227
    %v240 = vunpack.c.l.b16 %v228
    %v241 = vpack.c.b16 %v238, %v237
    %v242 = vpack.c.b16 %v240, %v239
    %245 = vmatprep.subr.bf16.mxu0 0
    %246 = vmatpush1.bf16.msra.mxu0 %v241
    %247 = vmatprep.subr.bf16.mxu0 0
    %248 = vmatpush1.bf16.msra.mxu0 %v242
    %249 = vmatprep.subr.bf16.mxu0 0
    %250 = vmatpush1.bf16.msra.mxu0 0
    %251 = vmatprep.subr.bf16.mxu0 0
    %252 = vmatpush1.bf16.msra.mxu0 0
    %253 = vmatprep.subr.bf16.mxu0 0
    %254 = vmatpush1.bf16.msra.mxu0 0
    %255 = vmatprep.subr.bf16.mxu0 0
    %256 = vmatpush1.bf16.msra.mxu0 0
    %257 = vmatprep.subr.bf16.mxu0 0
    %258 = vmatpush1.bf16.msra.mxu0 0
    %259 = vmatprep.subr.bf16.mxu0 0
    %260 = vmatpush1.bf16.msra.mxu0 0
    %261 = vmatprep.subr.bf16.mxu0 0
    %262 = vmatpush1.bf16.msra.mxu0 0
    %263 = vmatprep.subr.bf16.mxu0 0
    %264 = vmatpush1.bf16.msra.mxu0 0
    %265 = vmatprep.subr.bf16.mxu0 0
    %266 = vmatpush1.bf16.msra.mxu0 0
    %267 = vmatprep.subr.bf16.mxu0 0
    %268 = vmatpush1.bf16.msra.mxu0 0
    %269 = vmatprep.subr.bf16.mxu0 0
    %270 = vmatpush1.bf16.msra.mxu0 0
    %271 = vmatprep.subr.bf16.mxu0 0
    %272 = vmatpush1.bf16.msra.mxu0 0
    %273 = vmatprep.subr.bf16.mxu0 0
    %274 = vmatpush1.bf16.msra.mxu0 0
    %275 = vmatprep.subr.bf16.mxu0 0
    %276 = vmatpush1.bf16.msra.mxu0 0
    %277 = vmatprep.mubr.bf16.mxu0 0
    %278 = vmatmul.mubr.bf16.gmra.mrb[0].mxu0 %v121
    %v279 = vpop.f32.mrb[0].mxu0
    %v280 = vadd.f32 %v232, %v279
    %v281 = vpop.f32.mrb[0].mxu0
    %v282 = vpop.f32.mrb[0].mxu0
    %v283 = vadd.f32 %v232, %v282
    %v284 = vpop.f32.mrb[0].mxu0
    %285 = vdwg.mxu0
    %v286 = vpack.c.bf16 %v161, %v158
    %v287 = vpack.c.bf16 %v222, %v219
    %v288 = vpack.c.bf16 %v283, %v280
    %v289 = vlaneseq
    %v290 = vshrl.u32 %v289, 7
    %v291 = vadd.s32 %v290, 8
    %v292 = vlaneseq
    %v293 = vand.u32 %v292, 127
    %v294 = vxor.u32 %v290, %v293
    %v295 = vxor.u32 %v291, %v293
    %v296 = vand.u32 %v294, 1
    %v297 = vand.u32 %v295, 1
    %vm298 = vcmp.eq.s32.totalorder %v296, 0
    %vm299 = vcmp.eq.s32.totalorder %v297, 0
    %vm300 = vcmp.ge.s32.totalorder %v293, 0
    %vm301 = vcmp.lt.s32.totalorder %v293, 8
    %vm302 = vmand %vm300, %vm301
    %v303 = vsel %vm302, 1, 0
    %v304 = vcvt.s32.f32 %v303
    %v305 = vpack.c.bf16 %v304, %v304
    %v306 = vmul.bf16 %v287, %v305
    %v307 = vmul.bf16 %v288, %v305
    %v309 = vsel %vm119, %v286, 0
    %v312 = vsel %vm119, %v306, 0
    %314 = vmatprep.subr.bf16.mxu0 0
    %315 = vmatpush1.bf16.xpose.msra.mxu0 %v312
    %316 = vmatprep.subr.bf16.mxu0 0
    %317 = vmatpush1.bf16.xpose.msra.mxu0 0
    %318 = vmatprep.subr.bf16.mxu0 0
    %319 = vmatpush1.bf16.xpose.msra.mxu0 0
    %320 = vmatprep.subr.bf16.mxu0 0
    %321 = vmatpush1.bf16.xpose.msra.mxu0 0
    %322 = vmatprep.subr.bf16.mxu0 0
    %323 = vmatpush1.bf16.xpose.msra.mxu0 0
    %324 = vmatprep.subr.bf16.mxu0 0
    %325 = vmatpush1.bf16.xpose.msra.mxu0 0
    %326 = vmatprep.subr.bf16.mxu0 0
    %327 = vmatpush1.bf16.xpose.msra.mxu0 0
    %328 = vmatprep.subr.bf16.mxu0 0
    %329 = vmatpush1.bf16.xpose.msra.mxu0 0
    %330 = vmatprep.subr.bf16.mxu0 0
    %331 = vmatpush1.bf16.xpose.msra.mxu0 0
    %332 = vmatprep.subr.bf16.mxu0 0
    %333 = vmatpush1.bf16.xpose.msra.mxu0 0
    %334 = vmatprep.subr.bf16.mxu0 0
    %335 = vmatpush1.bf16.xpose.msra.mxu0 0
    %336 = vmatprep.subr.bf16.mxu0 0
    %337 = vmatpush1.bf16.xpose.msra.mxu0 0
    %338 = vmatprep.subr.bf16.mxu0 0
    %339 = vmatpush1.bf16.xpose.msra.mxu0 0
    %340 = vmatprep.subr.bf16.mxu0 0
    %341 = vmatpush1.bf16.xpose.msra.mxu0 0
    %342 = vmatprep.subr.bf16.mxu0 0
    %343 = vmatpush1.bf16.xpose.msra.mxu0 0
    %344 = vmatprep.subr.bf16.mxu0 0
    %345 = vmatpush1.bf16.xpose.msra.mxu0 0
    %346 = vmatprep.mubr.bf16.mxu0 0
    %347 = vmatmul.mubr.bf16.gmra.mrb[0].mxu0 %v309
    %v348 = vpop.f32.mrb[0].mxu0
    %v349 = vadd.f32 0.0, %v348
    %v350 = vpop.f32.mrb[0].mxu0
    %v351 = vpop.f32.mrb[0].mxu0
    %v352 = vadd.f32 0.0, %v351
    %v353 = vpop.f32.mrb[0].mxu0
    %354 = vdwg.mxu0
    %vm355 = vcmask 130048
    %v356 = vsel %vm355, %v349, -inf
    %357 = vmax.xlane.f32.xlu0 %v356
    %v358 = vpop.xlane.xlu0 %357
    %v359 = vsel %vm355, %v352, -inf
    %360 = vmax.xlane.f32.xlu0 %v359
    %v361 = vpop.xlane.xlu0 %360
    %v362 = vsub.f32 %v349, %v358
    %v363 = vsub.f32 %v352, %v361
    %v364 = vmul.f32 %v362, 1.442695
    %v365 = vpow.pop %v364
    %v366 = vmul.f32 %v363, 1.442695
    %v367 = vpow.pop %v366
    %v368 = vsel %vm298, %v365, 0.0
    %v369 = vsel %vm299, %v367, 0.0
    %v370 = vsel %vm355, %v368, 0.0
    %371 = vadd.xlane.f32.xlu0 %v370
    %v372 = vpop.xlane.xlu0 %371
    %v373 = vsel %vm355, %v369, 0.0
    %374 = vadd.xlane.f32.xlu0 %v373
    %v375 = vpop.xlane.xlu0 %374
    %v376 = vrcp.pop %v372
    %v377 = vrcp.pop %v375
    %v378 = vmul.f32 %v368, %v376
    %v379 = vmul.f32 %v369, %v377
    %v380 = vpack.c.bf16 %v379, %v378
    %vm381 = vcmp.ge.s32.totalorder %v293, 8
    %vm382 = vcmp.lt.s32.totalorder %v293, 16
    %vm383 = vmand %vm381, %vm382
    %v384 = vsel %vm383, 1, 0
    %v385 = vcvt.s32.f32 %v384
    %v386 = vpack.c.bf16 %v385, %v385
    %v387 = vmul.bf16 %v287, %v386
    %v388 = vmul.bf16 %v288, %v386
    %v390 = vsel %vm119, %v387, 0
    %392 = vmatprep.subr.bf16.mxu0 0
    %393 = vmatpush1.bf16.xpose.msra.mxu0 %v390
    %394 = vmatprep.subr.bf16.mxu0 0
    %395 = vmatpush1.bf16.xpose.msra.mxu0 0
    %396 = vmatprep.subr.bf16.mxu0 0
    %397 = vmatpush1.bf16.xpose.msra.mxu0 0
    %398 = vmatprep.subr.bf16.mxu0 0
    %399 = vmatpush1.bf16.xpose.msra.mxu0 0
    %400 = vmatprep.subr.bf16.mxu0 0
    %401 = vmatpush1.bf16.xpose.msra.mxu0 0
    %402 = vmatprep.subr.bf16.mxu0 0
    %403 = vmatpush1.bf16.xpose.msra.mxu0 0
    %404 = vmatprep.subr.bf16.mxu0 0
    %405 = vmatpush1.bf16.xpose.msra.mxu0 0
    %406 = vmatprep.subr.bf16.mxu0 0
    %407 = vmatpush1.bf16.xpose.msra.mxu0 0
    %408 = vmatprep.subr.bf16.mxu0 0
    %409 = vmatpush1.bf16.xpose.msra.mxu0 0
    %410 = vmatprep.subr.bf16.mxu0 0
    %411 = vmatpush1.bf16.xpose.msra.mxu0 0
    %412 = vmatprep.subr.bf16.mxu0 0
    %413 = vmatpush1.bf16.xpose.msra.mxu0 0
    %414 = vmatprep.subr.bf16.mxu0 0
    %415 = vmatpush1.bf16.xpose.msra.mxu0 0
    %416 = vmatprep.subr.bf16.mxu0 0
    %417 = vmatpush1.bf16.xpose.msra.mxu0 0
    %418 = vmatprep.subr.bf16.mxu0 0
    %419 = vmatpush1.bf16.xpose.msra.mxu0 0
    %420 = vmatprep.subr.bf16.mxu0 0
    %421 = vmatpush1.bf16.xpose.msra.mxu0 0
    %422 = vmatprep.subr.bf16.mxu0 0
    %423 = vmatpush1.bf16.xpose.msra.mxu0 0
    %424 = vmatprep.mubr.bf16.mxu0 0
    %425 = vmatmul.mubr.bf16.gmra.mrb[0].mxu0 %v309
    %v426 = vpop.f32.mrb[0].mxu0
    %v427 = vadd.f32 0.0, %v426
    %v428 = vpop.f32.mrb[0].mxu0
    %v429 = vpop.f32.mrb[0].mxu0
    %v430 = vadd.f32 0.0, %v429
    %v431 = vpop.f32.mrb[0].mxu0
    %432 = vdwg.mxu0
    %v433 = vsel %vm355, %v427, -inf
    %434 = vmax.xlane.f32.xlu0 %v433
    %v435 = vpop.xlane.xlu0 %434
    %v436 = vsel %vm355, %v430, -inf
    %437 = vmax.xlane.f32.xlu0 %v436
    %v438 = vpop.xlane.xlu0 %437
    %v439 = vsub.f32 %v427, %v435
    %v440 = vsub.f32 %v430, %v438
    %v441 = vmul.f32 %v439, 1.442695
    %v442 = vpow.pop %v441
    %v443 = vmul.f32 %v440, 1.442695
    %v444 = vpow.pop %v443
    %v445 = vsel %vm298, %v442, 0.0
    %v446 = vsel %vm299, %v444, 0.0
    %v447 = vsel %vm355, %v445, 0.0
    %448 = vadd.xlane.f32.xlu0 %v447
    %v449 = vpop.xlane.xlu0 %448
    %v450 = vsel %vm355, %v446, 0.0
    %451 = vadd.xlane.f32.xlu0 %v450
    %v452 = vpop.xlane.xlu0 %451
    %v453 = vrcp.pop %v449
    %v454 = vrcp.pop %v452
    %v455 = vmul.f32 %v445, %v453
    %v456 = vmul.f32 %v446, %v454
    %v457 = vpack.c.bf16 %v456, %v455
    %v459 = vsel %vm355, %v457, 0
    %461 = vmatprep.subr.bf16.mxu0 0
    %462 = vmatpush1.bf16.msra.mxu0 %v388
    %463 = vmatprep.subr.bf16.mxu0 0
    %464 = vmatpush1.bf16.msra.mxu0 0
    %465 = vmatprep.subr.bf16.mxu0 0
    %466 = vmatpush1.bf16.msra.mxu0 0
    %467 = vmatprep.subr.bf16.mxu0 0
    %468 = vmatpush1.bf16.msra.mxu0 0
    %469 = vmatprep.subr.bf16.mxu0 0
    %470 = vmatpush1.bf16.msra.mxu0 0
    %471 = vmatprep.subr.bf16.mxu0 0
    %472 = vmatpush1.bf16.msra.mxu0 0
    %473 = vmatprep.subr.bf16.mxu0 0
    %474 = vmatpush1.bf16.msra.mxu0 0
    %475 = vmatprep.subr.bf16.mxu0 0
    %476 = vmatpush1.bf16.msra.mxu0 0
    %477 = vmatprep.subr.bf16.mxu0 0
    %478 = vmatpush1.bf16.msra.mxu0 0
    %479 = vmatprep.subr.bf16.mxu0 0
    %480 = vmatpush1.bf16.msra.mxu0 0
    %481 = vmatprep.subr.bf16.mxu0 0
    %482 = vmatpush1.bf16.msra.mxu0 0
    %483 = vmatprep.subr.bf16.mxu0 0
    %484 = vmatpush1.bf16.msra.mxu0 0
    %485 = vmatprep.subr.bf16.mxu0 0
    %486 = vmatpush1.bf16.msra.mxu0 0
    %487 = vmatprep.subr.bf16.mxu0 0
    %488 = vmatpush1.bf16.msra.mxu0 0
    %489 = vmatprep.subr.bf16.mxu0 0
    %490 = vmatpush1.bf16.msra.mxu0 0
    %491 = vmatprep.subr.bf16.mxu0 0
    %492 = vmatpush1.bf16.msra.mxu0 0
    %493 = vmatprep.mubr.bf16.mxu0 0
    %494 = vmatmul.mubr.bf16.gmra.mrb[0].mxu0 %v459
    %v495 = vpop.f32.mrb[0].mxu0
    %v496 = vadd.f32 0.0, %v495
    %v497 = vpop.f32.mrb[0].mxu0
    %v498 = vpop.f32.mrb[0].mxu0
    %v499 = vadd.f32 0.0, %v498
    %v500 = vpop.f32.mrb[0].mxu0
    %501 = vdwg.mxu0
    %v503 = vsel %vm355, %v380, 0
    %505 = vmatprep.subr.bf16.mxu0 0
    %506 = vmatpush1.bf16.msra.mxu0 %v307
    %507 = vmatprep.subr.bf16.mxu0 0
    %508 = vmatpush1.bf16.msra.mxu0 0
    %509 = vmatprep.subr.bf16.mxu0 0
    %510 = vmatpush1.bf16.msra.mxu0 0
    %511 = vmatprep.subr.bf16.mxu0 0
    %512 = vmatpush1.bf16.msra.mxu0 0
    %513 = vmatprep.subr.bf16.mxu0 0
    %514 = vmatpush1.bf16.msra.mxu0 0
    %515 = vmatprep.subr.bf16.mxu0 0
    %516 = vmatpush1.bf16.msra.mxu0 0
    %517 = vmatprep.subr.bf16.mxu0 0
    %518 = vmatpush1.bf16.msra.mxu0 0
    %519 = vmatprep.subr.bf16.mxu0 0
    %520 = vmatpush1.bf16.msra.mxu0 0
    %521 = vmatprep.subr.bf16.mxu0 0
    %522 = vmatpush1.bf16.msra.mxu0 0
    %523 = vmatprep.subr.bf16.mxu0 0
    %524 = vmatpush1.bf16.msra.mxu0 0
    %525 = vmatprep.subr.bf16.mxu0 0
    %526 = vmatpush1.bf16.msra.mxu0 0
    %527 = vmatprep.subr.bf16.mxu0 0
    %528 = vmatpush1.bf16.msra.mxu0 0
    %529 = vmatprep.subr.bf16.mxu0 0
    %530 = vmatpush1.bf16.msra.mxu0 0
    %531 = vmatprep.subr.bf16.mxu0 0
    %532 = vmatpush1.bf16.msra.mxu0 0
    %533 = vmatprep.subr.bf16.mxu0 0
    %534 = vmatpush1.bf16.msra.mxu0 0
    %535 = vmatprep.subr.bf16.mxu0 0
    %536 = vmatpush1.bf16.msra.mxu0 0
    %537 = vmatprep.mubr.bf16.mxu0 0
    %538 = vmatmul.mubr.bf16.gmra.mrb[0].mxu0 %v503
    %v539 = vpop.f32.mrb[0].mxu0
    %v540 = vadd.f32 %v496, %v539
    %v541 = vpop.f32.mrb[0].mxu0
    %v542 = vpop.f32.mrb[0].mxu0
    %v543 = vadd.f32 %v499, %v542
    %v544 = vpop.f32.mrb[0].mxu0
    %545 = vdwg.mxu0
    %vm546 = vcmp.ge.s32.totalorder %v293, 16
    %vm547 = vcmp.lt.s32.totalorder %v293, 24
    %vm548 = vmand %vm546, %vm547
    %v549 = vsel %vm548, 1, 0
    %v550 = vcvt.s32.f32 %v549
    %v551 = vpack.c.bf16 %v550, %v550
    %v552 = vmul.bf16 %v287, %v551
    %v553 = vmul.bf16 %v288, %v551
    %v555 = vsel %vm119, %v552, 0
    %557 = vmatprep.subr.bf16.mxu0 0
    %558 = vmatpush1.bf16.xpose.msra.mxu0 %v555
    %559 = vmatprep.subr.bf16.mxu0 0
    %560 = vmatpush1.bf16.xpose.msra.mxu0 0
    %561 = vmatprep.subr.bf16.mxu0 0
    %562 = vmatpush1.bf16.xpose.msra.mxu0 0
    %563 = vmatprep.subr.bf16.mxu0 0
    %564 = vmatpush1.bf16.xpose.msra.mxu0 0
    %565 = vmatprep.subr.bf16.mxu0 0
    %566 = vmatpush1.bf16.xpose.msra.mxu0 0
    %567 = vmatprep.subr.bf16.mxu0 0
    %568 = vmatpush1.bf16.xpose.msra.mxu0 0
    %569 = vmatprep.subr.bf16.mxu0 0
    %570 = vmatpush1.bf16.xpose.msra.mxu0 0
    %571 = vmatprep.subr.bf16.mxu0 0
    %572 = vmatpush1.bf16.xpose.msra.mxu0 0
    %573 = vmatprep.subr.bf16.mxu0 0
    %574 = vmatpush1.bf16.xpose.msra.mxu0 0
    %575 = vmatprep.subr.bf16.mxu0 0
    %576 = vmatpush1.bf16.xpose.msra.mxu0 0
    %577 = vmatprep.subr.bf16.mxu0 0
    %578 = vmatpush1.bf16.xpose.msra.mxu0 0
    %579 = vmatprep.subr.bf16.mxu0 0
    %580 = vmatpush1.bf16.xpose.msra.mxu0 0
    %581 = vmatprep.subr.bf16.mxu0 0
    %582 = vmatpush1.bf16.xpose.msra.mxu0 0
    %583 = vmatprep.subr.bf16.mxu0 0
    %584 = vmatpush1.bf16.xpose.msra.mxu0 0
    %585 = vmatprep.subr.bf16.mxu0 0
    %586 = vmatpush1.bf16.xpose.msra.mxu0 0
    %587 = vmatprep.subr.bf16.mxu0 0
    %588 = vmatpush1.bf16.xpose.msra.mxu0 0
    %589 = vmatprep.mubr.bf16.mxu0 0
    %590 = vmatmul.mubr.bf16.gmra.mrb[0].mxu0 %v309
    %v591 = vpop.f32.mrb[0].mxu0
    %v592 = vadd.f32 0.0, %v591
    %v593 = vpop.f32.mrb[0].mxu0
    %v594 = vpop.f32.mrb[0].mxu0
    %v595 = vadd.f32 0.0, %v594
    %v596 = vpop.f32.mrb[0].mxu0
    %597 = vdwg.mxu0
    %v598 = vsel %vm355, %v592, -inf
    %599 = vmax.xlane.f32.xlu0 %v598
    %v600 = vpop.xlane.xlu0 %599
    %v601 = vsel %vm355, %v595, -inf
    %602 = vmax.xlane.f32.xlu0 %v601
    %v603 = vpop.xlane.xlu0 %602
    %v604 = vsub.f32 %v592, %v600
    %v605 = vsub.f32 %v595, %v603
    %v606 = vmul.f32 %v604, 1.442695
    %v607 = vpow.pop %v606
    %v608 = vmul.f32 %v605, 1.442695
    %v609 = vpow.pop %v608
    %v610 = vsel %vm298, %v607, 0.0
    %v611 = vsel %vm299, %v609, 0.0
    %v612 = vsel %vm355, %v610, 0.0
    %613 = vadd.xlane.f32.xlu0 %v612
    %v614 = vpop.xlane.xlu0 %613
    %v615 = vsel %vm355, %v611, 0.0
    %616 = vadd.xlane.f32.xlu0 %v615
    %v617 = vpop.xlane.xlu0 %616
    %v618 = vrcp.pop %v614
    %v619 = vrcp.pop %v617
    %v620 = vmul.f32 %v610, %v618
    %v621 = vmul.f32 %v611, %v619
    %v622 = vpack.c.bf16 %v621, %v620
    %v624 = vsel %vm355, %v622, 0
    %626 = vmatprep.subr.bf16.mxu0 0
    %627 = vmatpush1.bf16.msra.mxu0 %v553
    %628 = vmatprep.subr.bf16.mxu0 0
    %629 = vmatpush1.bf16.msra.mxu0 0
    %630 = vmatprep.subr.bf16.mxu0 0
    %631 = vmatpush1.bf16.msra.mxu0 0
    %632 = vmatprep.subr.bf16.mxu0 0
    %633 = vmatpush1.bf16.msra.mxu0 0
    %634 = vmatprep.subr.bf16.mxu0 0
    %635 = vmatpush1.bf16.msra.mxu0 0
    %636 = vmatprep.subr.bf16.mxu0 0
    %637 = vmatpush1.bf16.msra.mxu0 0
    %638 = vmatprep.subr.bf16.mxu0 0
    %639 = vmatpush1.bf16.msra.mxu0 0
    %640 = vmatprep.subr.bf16.mxu0 0
    %641 = vmatpush1.bf16.msra.mxu0 0
    %642 = vmatprep.subr.bf16.mxu0 0
    %643 = vmatpush1.bf16.msra.mxu0 0
    %644 = vmatprep.subr.bf16.mxu0 0
    %645 = vmatpush1.bf16.msra.mxu0 0
    %646 = vmatprep.subr.bf16.mxu0 0
    %647 = vmatpush1.bf16.msra.mxu0 0
    %648 = vmatprep.subr.bf16.mxu0 0
    %649 = vmatpush1.bf16.msra.mxu0 0
    %650 = vmatprep.subr.bf16.mxu0 0
    %651 = vmatpush1.bf16.msra.mxu0 0
    %652 = vmatprep.subr.bf16.mxu0 0
    %653 = vmatpush1.bf16.msra.mxu0 0
    %654 = vmatprep.subr.bf16.mxu0 0
    %655 = vmatpush1.bf16.msra.mxu0 0
    %656 = vmatprep.subr.bf16.mxu0 0
    %657 = vmatpush1.bf16.msra.mxu0 0
    %658 = vmatprep.mubr.bf16.mxu0 0
    %659 = vmatmul.mubr.bf16.gmra.mrb[0].mxu0 %v624
    %v660 = vpop.f32.mrb[0].mxu0
    %v661 = vadd.f32 0.0, %v660
    %v662 = vpop.f32.mrb[0].mxu0
    %v663 = vpop.f32.mrb[0].mxu0
    %v664 = vadd.f32 0.0, %v663
    %v665 = vpop.f32.mrb[0].mxu0
    %666 = vdwg.mxu0
    %v667 = vadd.f32 %v540, %v661
    %v668 = vadd.f32 %v543, %v664
    %vm669 = vcmp.ge.s32.totalorder %v293, 24
    %vm670 = vcmp.lt.s32.totalorder %v293, 32
    %vm671 = vmand %vm669, %vm670
    %v672 = vsel %vm671, 1, 0
    %v673 = vcvt.s32.f32 %v672
    %v674 = vpack.c.bf16 %v673, %v673
    %v675 = vmul.bf16 %v287, %v674
    %v676 = vmul.bf16 %v288, %v674
    %v678 = vsel %vm119, %v675, 0
    %680 = vmatprep.subr.bf16.mxu0 0
    %681 = vmatpush1.bf16.xpose.msra.mxu0 %v678
    %682 = vmatprep.subr.bf16.mxu0 0
    %683 = vmatpush1.bf16.xpose.msra.mxu0 0
    %684 = vmatprep.subr.bf16.mxu0 0
    %685 = vmatpush1.bf16.xpose.msra.mxu0 0
    %686 = vmatprep.subr.bf16.mxu0 0
    %687 = vmatpush1.bf16.xpose.msra.mxu0 0
    %688 = vmatprep.subr.bf16.mxu0 0
    %689 = vmatpush1.bf16.xpose.msra.mxu0 0
    %690 = vmatprep.subr.bf16.mxu0 0
    %691 = vmatpush1.bf16.xpose.msra.mxu0 0
    %692 = vmatprep.subr.bf16.mxu0 0
    %693 = vmatpush1.bf16.xpose.msra.mxu0 0
    %694 = vmatprep.subr.bf16.mxu0 0
    %695 = vmatpush1.bf16.xpose.msra.mxu0 0
    %696 = vmatprep.subr.bf16.mxu0 0
    %697 = vmatpush1.bf16.xpose.msra.mxu0 0
    %698 = vmatprep.subr.bf16.mxu0 0
    %699 = vmatpush1.bf16.xpose.msra.mxu0 0
    %700 = vmatprep.subr.bf16.mxu0 0
    %701 = vmatpush1.bf16.xpose.msra.mxu0 0
    %702 = vmatprep.subr.bf16.mxu0 0
    %703 = vmatpush1.bf16.xpose.msra.mxu0 0
    %704 = vmatprep.subr.bf16.mxu0 0
    %705 = vmatpush1.bf16.xpose.msra.mxu0 0
    %706 = vmatprep.subr.bf16.mxu0 0
    %707 = vmatpush1.bf16.xpose.msra.mxu0 0
    %708 = vmatprep.subr.bf16.mxu0 0
    %709 = vmatpush1.bf16.xpose.msra.mxu0 0
    %710 = vmatprep.subr.bf16.mxu0 0
    %711 = vmatpush1.bf16.xpose.msra.mxu0 0
    %712 = vmatprep.mubr.bf16.mxu0 0
    %713 = vmatmul.mubr.bf16.gmra.mrb[0].mxu0 %v309
    %v714 = vpop.f32.mrb[0].mxu0
    %v715 = vadd.f32 0.0, %v714
    %v716 = vpop.f32.mrb[0].mxu0
    %v717 = vpop.f32.mrb[0].mxu0
    %v718 = vadd.f32 0.0, %v717
    %v719 = vpop.f32.mrb[0].mxu0
    %720 = vdwg.mxu0
    %v721 = vsel %vm355, %v715, -inf
    %722 = vmax.xlane.f32.xlu0 %v721
    %v723 = vpop.xlane.xlu0 %722
    %v724 = vsel %vm355, %v718, -inf
    %725 = vmax.xlane.f32.xlu0 %v724
    %v726 = vpop.xlane.xlu0 %725
    %v727 = vsub.f32 %v715, %v723
    %v728 = vsub.f32 %v718, %v726
    %v729 = vmul.f32 %v727, 1.442695
    %v730 = vpow.pop %v729
    %v731 = vmul.f32 %v728, 1.442695
    %v732 = vpow.pop %v731
    %v733 = vsel %vm298, %v730, 0.0
    %v734 = vsel %vm299, %v732, 0.0
    %v735 = vsel %vm355, %v733, 0.0
    %736 = vadd.xlane.f32.xlu0 %v735
    %v737 = vpop.xlane.xlu0 %736
    %v738 = vsel %vm355, %v734, 0.0
    %739 = vadd.xlane.f32.xlu0 %v738
    %v740 = vpop.xlane.xlu0 %739
    %v741 = vrcp.pop %v737
    %v742 = vrcp.pop %v740
    %v743 = vmul.f32 %v733, %v741
    %v744 = vmul.f32 %v734, %v742
    %v745 = vpack.c.bf16 %v744, %v743
    %v747 = vsel %vm355, %v745, 0
    %749 = vmatprep.subr.bf16.mxu0 0
    %750 = vmatpush1.bf16.msra.mxu0 %v676
    %751 = vmatprep.subr.bf16.mxu0 0
    %752 = vmatpush1.bf16.msra.mxu0 0
    %753 = vmatprep.subr.bf16.mxu0 0
    %754 = vmatpush1.bf16.msra.mxu0 0
    %755 = vmatprep.subr.bf16.mxu0 0
    %756 = vmatpush1.bf16.msra.mxu0 0
    %757 = vmatprep.subr.bf16.mxu0 0
    %758 = vmatpush1.bf16.msra.mxu0 0
    %759 = vmatprep.subr.bf16.mxu0 0
    %760 = vmatpush1.bf16.msra.mxu0 0
    %761 = vmatprep.subr.bf16.mxu0 0
    %762 = vmatpush1.bf16.msra.mxu0 0
    %763 = vmatprep.subr.bf16.mxu0 0
    %764 = vmatpush1.bf16.msra.mxu0 0
    %765 = vmatprep.subr.bf16.mxu0 0
    %766 = vmatpush1.bf16.msra.mxu0 0
    %767 = vmatprep.subr.bf16.mxu0 0
    %768 = vmatpush1.bf16.msra.mxu0 0
    %769 = vmatprep.subr.bf16.mxu0 0
    %770 = vmatpush1.bf16.msra.mxu0 0
    %771 = vmatprep.subr.bf16.mxu0 0
    %772 = vmatpush1.bf16.msra.mxu0 0
    %773 = vmatprep.subr.bf16.mxu0 0
    %774 = vmatpush1.bf16.msra.mxu0 0
    %775 = vmatprep.subr.bf16.mxu0 0
    %776 = vmatpush1.bf16.msra.mxu0 0
    %777 = vmatprep.subr.bf16.mxu0 0
    %778 = vmatpush1.bf16.msra.mxu0 0
    %779 = vmatprep.subr.bf16.mxu0 0
    %780 = vmatpush1.bf16.msra.mxu0 0
    %781 = vmatprep.mubr.bf16.mxu0 0
    %782 = vmatmul.mubr.bf16.gmra.mrb[0].mxu0 %v747
    %v783 = vpop.f32.mrb[0].mxu0
    %v784 = vadd.f32 0.0, %v783
    %v785 = vpop.f32.mrb[0].mxu0
    %v786 = vpop.f32.mrb[0].mxu0
    %v787 = vadd.f32 0.0, %v786
    %v788 = vpop.f32.mrb[0].mxu0
    %789 = vdwg.mxu0
    %v790 = vadd.f32 %v667, %v784
    %v791 = vadd.f32 %v668, %v787
    %v792 = vpack.c.bf16 %v791, %v790
    %v793 = vld [vmem:[#allocation5] sm:$0xf]
    %v794 = vld [vmem:[#allocation5 + $0x4] sm:$0xf]
    %v795 = vld [vmem:[#allocation5 + $0x8] sm:$0xf]
    %v796 = vld [vmem:[#allocation5 + $0xc] sm:$0xf]
    %v797 = vlaneseq
    %v798 = vshrl.u32 %v797, 7
    %v799 = vsub.s32 0, %v798
    %v800 = vrot.slane %v92, %v799
    %v805 = vunpack.c.l.b16 %v793
    %v806 = vunpack.c.l.b16 %v794
    %v807 = vunpack.c.l.b16 %v795
    %v808 = vunpack.c.l.b16 %v796
    %v809 = vpack.c.b16 %v806, %v805
    %v810 = vpack.c.b16 %v808, %v807
    %v814 = vsel %vm119, %v792, 0
    %816 = vmatprep.subr.bf16.mxu0 0
    %817 = vmatpush1.bf16.msra.mxu0 %v809
    %818 = vmatprep.subr.bf16.mxu0 0
    %819 = vmatpush1.bf16.msra.mxu0 %v810
    %820 = vmatprep.subr.bf16.mxu0 0
    %821 = vmatpush1.bf16.msra.mxu0 0
    %822 = vmatprep.subr.bf16.mxu0 0
    %823 = vmatpush1.bf16.msra.mxu0 0
    %824 = vmatprep.subr.bf16.mxu0 0
    %825 = vmatpush1.bf16.msra.mxu0 0
    %826 = vmatprep.subr.bf16.mxu0 0
    %827 = vmatpush1.bf16.msra.mxu0 0
    %828 = vmatprep.subr.bf16.mxu0 0
    %829 = vmatpush1.bf16.msra.mxu0 0
    %830 = vmatprep.subr.bf16.mxu0 0
    %831 = vmatpush1.bf16.msra.mxu0 0
    %832 = vmatprep.subr.bf16.mxu0 0
    %833 = vmatpush1.bf16.msra.mxu0 0
    %834 = vmatprep.subr.bf16.mxu0 0
    %835 = vmatpush1.bf16.msra.mxu0 0
    %836 = vmatprep.subr.bf16.mxu0 0
    %837 = vmatpush1.bf16.msra.mxu0 0
    %838 = vmatprep.subr.bf16.mxu0 0
    %839 = vmatpush1.bf16.msra.mxu0 0
    %840 = vmatprep.subr.bf16.mxu0 0
    %841 = vmatpush1.bf16.msra.mxu0 0
    %842 = vmatprep.subr.bf16.mxu0 0
    %843 = vmatpush1.bf16.msra.mxu0 0
    %844 = vmatprep.subr.bf16.mxu0 0
    %845 = vmatpush1.bf16.msra.mxu0 0
    %846 = vmatprep.subr.bf16.mxu0 0
    %847 = vmatpush1.bf16.msra.mxu0 0
    %848 = vmatprep.mubr.bf16.mxu0 0
    %849 = vmatmul.mubr.bf16.gmra.mrb[0].mxu0 %v814
    %v850 = vpop.f32.mrb[0].mxu0
    %v851 = vadd.f32 %v800, %v850
    %v852 = vpop.f32.mrb[0].mxu0
    %v853 = vpop.f32.mrb[0].mxu0
    %v854 = vadd.f32 %v800, %v853
    %v855 = vpop.f32.mrb[0].mxu0
    %856 = vdwg.mxu0
    %v857 = vadd.f32 %v86, %v851
    %v858 = vadd.f32 %v87, %v854
    %v859 = vsel %vm119, %v857, 0.0
    %860 = vadd.xlane.f32.xlu0 %v859
    %v861 = vpop.xlane.xlu0 %860
    %v862 = vsel %vm119, %v858, 0.0
    %863 = vadd.xlane.f32.xlu0 %v862
    %v864 = vpop.xlane.xlu0 %863
    %v865 = vrcp.pop 32.0
    %v866 = vmul.f32 %v861, %v865
    %v867 = vmul.f32 %v864, %v865
    %v868 = vsub.f32 %v857, %v866
    %v869 = vsub.f32 %v858, %v867
    %v870 = vmul.f32 %v868, %v868
    %v871 = vmul.f32 %v869, %v869
    %v872 = vsel %vm119, %v870, 0.0
    %873 = vadd.xlane.f32.xlu0 %v872
    %v874 = vpop.xlane.xlu0 %873
    %v875 = vsel %vm119, %v871, 0.0
    %876 = vadd.xlane.f32.xlu0 %v875
    %v877 = vpop.xlane.xlu0 %876
    %v878 = vmul.f32 %v874, %v865
    %v879 = vmul.f32 %v877, %v865
    %v880 = vadd.f32 %v878, 1e-05
    %v881 = vadd.f32 %v879, 1e-05
    %v882 = vrsqrt.pop %v880
    %v883 = vrsqrt.pop %v881
    %v884 = vmul.f32 %v868, %v882
    %v885 = vmul.f32 %v869, %v883
    %v886 = vlaneseq
    %v887 = vshrl.u32 %v886, 7
    %v888 = vsub.s32 0, %v887
    %v889 = vrot.slane %v95, %v888
    %v890 = vmul.f32 %v884, %v889
    %v891 = vmul.f32 %v885, %v889
    %v892 = vlaneseq
    %v893 = vshrl.u32 %v892, 7
    %v894 = vsub.s32 0, %v893
    %v895 = vrot.slane %v96, %v894
    %v896 = vadd.f32 %v890, %v895
    %v897 = vadd.f32 %v891, %v895
    %v898 = vpack.c.bf16 %v897, %v896
    %v899 = vld [vmem:[#allocation7] sm:$0xf]
    %v900 = vld [vmem:[#allocation7 + $0x4] sm:$0xf]
    %v901 = vld [vmem:[#allocation7 + $0x8] sm:$0xf]
    %v902 = vld [vmem:[#allocation7 + $0xc] sm:$0xf]
    %v903 = vlaneseq
    %v904 = vshrl.u32 %v903, 7
    %v905 = vsub.s32 0, %v904
    %v906 = vrot.slane %v93, %v905
    %v911 = vunpack.c.l.b16 %v899
    %v912 = vunpack.c.l.b16 %v900
    %v913 = vunpack.c.l.b16 %v901
    %v914 = vunpack.c.l.b16 %v902
    %v915 = vpack.c.b16 %v912, %v911
    %v916 = vpack.c.b16 %v914, %v913
    %v920 = vsel %vm119, %v898, 0
    %922 = vmatprep.subr.bf16.mxu0 0
    %923 = vmatpush1.bf16.msra.mxu0 %v915
    %924 = vmatprep.subr.bf16.mxu0 0
    %925 = vmatpush1.bf16.msra.mxu0 %v916
    %926 = vmatprep.subr.bf16.mxu0 0
    %927 = vmatpush1.bf16.msra.mxu0 0
    %928 = vmatprep.subr.bf16.mxu0 0
    %929 = vmatpush1.bf16.msra.mxu0 0
    %930 = vmatprep.subr.bf16.mxu0 0
    %931 = vmatpush1.bf16.msra.mxu0 0
    %932 = vmatprep.subr.bf16.mxu0 0
    %933 = vmatpush1.bf16.msra.mxu0 0
    %934 = vmatprep.subr.bf16.mxu0 0
    %935 = vmatpush1.bf16.msra.mxu0 0
    %936 = vmatprep.subr.bf16.mxu0 0
    %937 = vmatpush1.bf16.msra.mxu0 0
    %938 = vmatprep.subr.bf16.mxu0 0
    %939 = vmatpush1.bf16.msra.mxu0 0
    %940 = vmatprep.subr.bf16.mxu0 0
    %941 = vmatpush1.bf16.msra.mxu0 0
    %942 = vmatprep.subr.bf16.mxu0 0
    %943 = vmatpush1.bf16.msra.mxu0 0
    %944 = vmatprep.subr.bf16.mxu0 0
    %945 = vmatpush1.bf16.msra.mxu0 0
    %946 = vmatprep.subr.bf16.mxu0 0
    %947 = vmatpush1.bf16.msra.mxu0 0
    %948 = vmatprep.subr.bf16.mxu0 0
    %949 = vmatpush1.bf16.msra.mxu0 0
    %950 = vmatprep.subr.bf16.mxu0 0
    %951 = vmatpush1.bf16.msra.mxu0 0
    %952 = vmatprep.subr.bf16.mxu0 0
    %953 = vmatpush1.bf16.msra.mxu0 0
    %954 = vmatprep.mubr.bf16.mxu0 0
    %955 = vmatmul.mubr.bf16.gmra.mrb[0].mxu0 %v920
    %v956 = vpop.f32.mrb[0].mxu0
    %v957 = vadd.f32 %v906, %v956
    %v958 = vpop.f32.mrb[0].mxu0
    %v959 = vpop.f32.mrb[0].mxu0
    %v960 = vadd.f32 %v906, %v959
    %v961 = vpop.f32.mrb[0].mxu0
    %962 = vdwg.mxu0
    %v963 = vmul.f32 %v957, 0.5
    %v964 = vmul.f32 %v960, 0.5
    %v965 = vmul.f32 %v957, 0.044715
    %v966 = vmul.f32 %v960, 0.044715
    %v967 = vmul.f32 %v965, %v957
    %v968 = vmul.f32 %v966, %v960
    %v969 = vmul.f32 %v967, %v957
    %v970 = vmul.f32 %v968, %v960
    %v971 = vadd.f32 %v957, %v969
    %v972 = vadd.f32 %v960, %v970
    %v973 = vmul.f32 %v971, 0.7978846
    %v974 = vmul.f32 %v972, 0.7978846
    %v975 = vtanh.pop %v973
    %v976 = vtanh.pop %v974
    %v977 = vadd.f32 %v975, 1.0
    %v978 = vadd.f32 %v976, 1.0
    %v979 = vmul.f32 %v963, %v977
    %v980 = vmul.f32 %v964, %v978
    %v981 = vpack.c.bf16 %v980, %v979
    %v982 = vld [vmem:[%s6] sm:$0xf]
    %v983 = vld [vmem:[%s6 + $0x4] sm:$0xf]
    %v984 = vld [vmem:[%s6 + $0x8] sm:$0xf]
    %v985 = vld [vmem:[%s6 + $0xc] sm:$0xf]
    %v986 = vld [vmem:[%s6 + $0x10] sm:$0xf]
    %v987 = vld [vmem:[%s6 + $0x14] sm:$0xf]
    %v988 = vld [vmem:[%s6 + $0x18] sm:$0xf]
    %v989 = vld [vmem:[%s6 + $0x1c] sm:$0xf]
    %v990 = vlaneseq
    %v991 = vshrl.u32 %v990, 7
    %v992 = vsub.s32 0, %v991
    %v993 = vrot.slane %v94, %v992
    %v1002 = vunpack.c.l.b16 %v982
    %v1003 = vunpack.c.l.b16 %v983
    %v1004 = vunpack.c.l.b16 %v984
    %v1005 = vunpack.c.l.b16 %v985
    %v1006 = vunpack.c.l.b16 %v986
    %v1007 = vunpack.c.l.b16 %v987
    %v1008 = vunpack.c.l.b16 %v988
    %v1009 = vunpack.c.l.b16 %v989
    %v1010 = vpack.c.b16 %v1003, %v1002
    %v1011 = vpack.c.b16 %v1005, %v1004
    %v1012 = vpack.c.b16 %v1007, %v1006
    %v1013 = vpack.c.b16 %v1009, %v1008
    %vm1018 = vcmask 523264
    %v1020 = vsel %vm1018, %v981, 0
    %1022 = vmatprep.subr.bf16.mxu0 0
    %1023 = vmatpush1.bf16.msra.mxu0 %v1010
    %1024 = vmatprep.subr.bf16.mxu0 0
    %1025 = vmatpush1.bf16.msra.mxu0 %v1011
    %1026 = vmatprep.subr.bf16.mxu0 0
    %1027 = vmatpush1.bf16.msra.mxu0 %v1012
    %1028 = vmatprep.subr.bf16.mxu0 0
    %1029 = vmatpush1.bf16.msra.mxu0 %v1013
    %1030 = vmatprep.subr.bf16.mxu0 0
    %1031 = vmatpush1.bf16.msra.mxu0 0
    %1032 = vmatprep.subr.bf16.mxu0 0
    %1033 = vmatpush1.bf16.msra.mxu0 0
    %1034 = vmatprep.subr.bf16.mxu0 0
    %1035 = vmatpush1.bf16.msra.mxu0 0
    %1036 = vmatprep.subr.bf16.mxu0 0
    %1037 = vmatpush1.bf16.msra.mxu0 0
    %1038 = vmatprep.subr.bf16.mxu0 0
    %1039 = vmatpush1.bf16.msra.mxu0 0
    %1040 = vmatprep.subr.bf16.mxu0 0
    %1041 = vmatpush1.bf16.msra.mxu0 0
    %1042 = vmatprep.subr.bf16.mxu0 0
    %1043 = vmatpush1.bf16.msra.mxu0 0
    %1044 = vmatprep.subr.bf16.mxu0 0
    %1045 = vmatpush1.bf16.msra.mxu0 0
    %1046 = vmatprep.subr.bf16.mxu0 0
    %1047 = vmatpush1.bf16.msra.mxu0 0
    %1048 = vmatprep.subr.bf16.mxu0 0
    %1049 = vmatpush1.bf16.msra.mxu0 0
    %1050 = vmatprep.subr.bf16.mxu0 0
    %1051 = vmatpush1.bf16.msra.mxu0 0
    %1052 = vmatprep.subr.bf16.mxu0 0
    %1053 = vmatpush1.bf16.msra.mxu0 0
    %1054 = vmatprep.mubr.bf16.mxu0 0
    %1055 = vmatmul.mubr.bf16.gmra.mrb[0].mxu0 %v1020
    %v1056 = vpop.f32.mrb[0].mxu0
    %v1057 = vadd.f32 %v993, %v1056
    %v1058 = vpop.f32.mrb[0].mxu0
    %v1059 = vpop.f32.mrb[0].mxu0
    %v1060 = vadd.f32 %v993, %v1059
    %v1061 = vpop.f32.mrb[0].mxu0
    %1062 = vdwg.mxu0
    %v1063 = vadd.f32 %v896, %v1057
    %v1064 = vadd.f32 %v897, %v1060
    %v1065 = vsel %vm119, %v1063, 0.0
    %1066 = vadd.xlane.f32.xlu0 %v1065
    %v1067 = vpop.xlane.xlu0 %1066
    %v1068 = vsel %vm119, %v1064, 0.0
    %1069 = vadd.xlane.f32.xlu0 %v1068
    %v1070 = vpop.xlane.xlu0 %1069
    %v1071 = vmul.f32 %v1067, %v865
    %v1072 = vmul.f32 %v1070, %v865
    %v1073 = vsub.f32 %v1063, %v1071
    %v1074 = vsub.f32 %v1064, %v1072
    %v1075 = vmul.f32 %v1073, %v1073
    %v1076 = vmul.f32 %v1074, %v1074
    %v1077 = vsel %vm119, %v1075, 0.0
    %1078 = vadd.xlane.f32.xlu0 %v1077
    %v1079 = vpop.xlane.xlu0 %1078
    %v1080 = vsel %vm119, %v1076, 0.0
    %1081 = vadd.xlane.f32.xlu0 %v1080
    %v1082 = vpop.xlane.xlu0 %1081
    %v1083 = vmul.f32 %v1079, %v865
    %v1084 = vmul.f32 %v1082, %v865
    %v1085 = vadd.f32 %v1083, 1e-05
    %v1086 = vadd.f32 %v1084, 1e-05
    %v1087 = vrsqrt.pop %v1085
    %v1088 = vrsqrt.pop %v1086
    %v1089 = vmul.f32 %v1073, %v1087
    %v1090 = vmul.f32 %v1074, %v1088
    %v1091 = vlaneseq
    %v1092 = vshrl.u32 %v1091, 7
    %v1093 = vsub.s32 0, %v1092
    %v1094 = vrot.slane %v97, %v1093
    %v1095 = vmul.f32 %v1089, %v1094
    %v1096 = vmul.f32 %v1090, %v1094
    %v1097 = vlaneseq
    %v1098 = vshrl.u32 %v1097, 7
    %v1099 = vsub.s32 0, %v1098
    %v1100 = vrot.slane %v98, %v1099
    %v1101 = vadd.f32 %v1095, %v1100
    %v1102 = vadd.f32 %v1096, %v1100
    %1103 = vst.msk [vmem:[#allocation10] sm:$0xff] %vm119, %v1101
    %1104 = vst.msk [vmem:[#allocation10 + $0x8] sm:$0xff] %vm119, %v1102
    // Predicated region
    $region50: #{tpu_custom_call.1} parent=1 // pred_check
      _
    $region51: #{tpu_custom_call.1} parent=1 // pred_check_branch
      %1106 = sbr.rel (0) target = $region53
    $region52: #{tpu_custom_call.1} parent=1 // pred_region
      %s1108 = ssub.s32 256, 256
      %1109 = vsyncadd [#allocation4], %s1108
      %s1110 = sshll.u32 [#allocation10], 4
      %s1111 = int_to_ptr.vmem [resolvable:$true] %s1110
      %1116 = dma.vmem_to_hbm [thread:$0]  %s1111, 256, %s8, [#allocation4], 128, 128, 8
    $region53: #{tpu_custom_call.1} parent=1 // pred_fallthru
      _
    // Predicated region
    $region54: #{tpu_custom_call.1} parent=1 // pred_check
      _
    $region55: #{tpu_custom_call.1} parent=1 // pred_check_branch
      %1118 = sbr.rel (0) target = $region57
    $region56: #{tpu_custom_call.1} parent=1 // pred_region
      %1119 = dma.done [#allocation4], 256
    $region57: #{tpu_custom_call.1} parent=1 // pred_fallthru
      _
    %1120 = vsyncpa [#allocation3], 1
    %1121 = vsyncpa [#allocation6], 1
    %1122 = vsyncpa [#allocation9], 1
    %1123 = vsyncpa [#allocation4], 1

</llo_original>
